<compile_context>
chip_gen: v6e
topology: v6e:2x2x1
jax: 0.10.0
libtpu: 0.0.40
codegen_flags: <defaults>
</compile_context>

<pallas_src>
import functools

import jax
import jax.numpy as jnp
import numpy as np
from jax.experimental import pallas as pl
from jax.experimental.pallas import tpu as pltpu


def _round_up(x, m):
    return (x + m - 1) // m * m


def _residual_block_kernel(x_ref, w1_ref, w2_ref, pre_ref, bn1_ref, mask_ref,
                           o_ref, p0_ref, p1_ref, p2_ref, im1_ref, im2_ref,
                           *, H, W, mxu_dtype):
    """One image per grid step (channels-first, spatial flattened on lanes).

    x_ref   : (1, Cin, H*W)            raw input image (f32)
    w1_ref  : (Cout, 9*Cpi)            conv1 weights, taps folded into K
    w2_ref  : (Cout, 9*Cpo + Cpi)      conv2 weights + 1x1 shortcut K-slice
    pre_ref : (Cin, 2)                 folded pre-BN [scale | bias]
    bn1_ref : (Cout, 2)                folded bn1    [scale | bias]
    mask_ref: (1, Lp)                  1.0 on interior pixels of padded grid
    o_ref   : (1, Cout, Lp)            output in padded spatial coords
    p0_ref  : (Cpi, Lext)              zero-padded raw x        (scratch)
    p1_ref  : (Cpi, Lext)              zero-padded preact(x)    (scratch)
    p2_ref  : (Cpo, Lext)              zero-padded relu(bn1(conv1)) (scratch)
    im1_ref : (9*Cpi, Lp)              im2col buffer for conv1  (scratch)
    im2_ref : (9*Cpo + Cpi, Lp)        im2col buffer for conv2+shortcut
    """
    Wp, Hp = W + 2, H + 2
    Lp = Hp * Wp
    B0 = Wp + 1                       # zero "wing" so every tap shift is in-range
    Cin = x_ref.shape[1]
    Cout = o_ref.shape[1]
    Cpi = p0_ref.shape[0]             # Cin rounded up to a sublane tile
    Cpo = p2_ref.shape[0]             # Cout rounded up to a sublane tile

    # Zero only the small padded buffers (<= ~9 vregs total): their border /
    # wing lanes ARE the conv zero-padding; interiors are overwritten below.
    p0_ref[...] = jnp.zeros(p0_ref.shape, p0_ref.dtype)
    p1_ref[...] = jnp.zeros(p1_ref.shape, p1_ref.dtype)
    p2_ref[...] = jnp.zeros(p2_ref.shape, p2_ref.dtype)

    # Stage 1: pre-activation BN (folded affine) + ReLU on the whole lane-dense
    # (Cin, H*W) slab — single broadcast, no per-row work.
    x = x_ref[0]                                              # (Cin, H*W) f32
    y = jnp.maximum(x * pre_ref[:, 0:1] + pre_ref[:, 1:2], 0.0)

    # Scatter image rows (row stride W -> Wp) into the zero-padded flattened
    # buffers.  H is small & static -> constant-offset unrolled lane stores.
    for h in range(H):
        dst = B0 + (h + 1) * Wp + 1
        src = h * W
        p0_ref[0:Cin, dst:dst + W] = x[:, src:src + W].astype(p0_ref.dtype)
        p1_ref[0:Cin, dst:dst + W] = y[:, src:src + W].astype(p1_ref.dtype)

    # Constant lane shift of each of the 9 taps in the padded-flattened layout.
    offs = [(kh - 1) * Wp + (kw - 1) for kh in range(3) for kw in range(3)]

    # Stage 2: conv1 as ONE im2col matmul (taps folded into K), then folded
    # bn1 + ReLU + border mask on the whole (Cout, Lp) slab.
    for t, o in enumerate(offs):
        im1_ref[t * Cpi:(t + 1) * Cpi, :] = p1_ref[:, B0 + o:B0 + o + Lp]
    acc1 = jnp.dot(w1_ref[...], im1_ref[...],
                   preferred_element_type=jnp.float32)        # (Cout, Lp) f32
    z = jnp.maximum(acc1 * bn1_ref[:, 0:1] + bn1_ref[:, 1:2], 0.0)
    p2_ref[0:Cout, B0:B0 + Lp] = (z * mask_ref[...]).astype(p2_ref.dtype)

    # Stage 3: conv2 + fused 1x1 shortcut (extra K slice) as ONE matmul.
    for t, o in enumerate(offs):
        im2_ref[t * Cpo:(t + 1) * Cpo, :] = p2_ref[:, B0 + o:B0 + o + Lp]
    im2_ref[9 * Cpo:9 * Cpo + Cpi, :] = p0_ref[:, B0:B0 + Lp]
    out = jnp.dot(w2_ref[...], im2_ref[...],
                  preferred_element_type=jnp.float32)         # (Cout, Lp) f32
    o_ref[0] = out.astype(o_ref.dtype)


def preact_basic_residual_block(x_nchw, params, *, use_bf16_mxu=True):
    """NCHW in / NCHW out.  Parameters already folded (inference-mode BN)."""
    N, Cin, H, W = x_nchw.shape
    Cout = params["w1_hwio"].shape[-1]
    Hp, Wp = H + 2, W + 2
    Lp = Hp * Wp
    B0 = Wp + 1
    Lext = Lp + 2 * B0
    Cpi = _round_up(Cin, 8)
    Cpo = _round_up(Cout, 8)

    mxu_dtype = jnp.bfloat16 if use_bf16_mxu else jnp.float32

    # NCHW -> (N, C, H*W): free reshape, no transpose.
    x = x_nchw.reshape(N, Cin, H * W).astype(jnp.float32)

    # Re-lay weights for channels-first im2col matmuls, zero-padding each tap's
    # channel block to the sublane tile so the kernel only does aligned copies.
    w1_t = params["w1_hwio"].reshape(9, Cin, Cout).transpose(2, 0, 1)   # (Cout,9,Cin)
    w1p = (jnp.zeros((Cout, 9, Cpi), jnp.float32).at[:, :, :Cin].set(w1_t)
           .reshape(Cout, 9 * Cpi).astype(mxu_dtype))
    w2_t = params["w2_hwio"].reshape(9, Cout, Cout).transpose(2, 0, 1)  # (Cout,9,Cout)
    w2p = (jnp.zeros((Cout, 9, Cpo), jnp.float32).at[:, :, :Cout].set(w2_t)
           .reshape(Cout, 9 * Cpo))
    wscp = jnp.zeros((Cout, Cpi), jnp.float32).at[:, :Cin].set(params["wsc"].T)
    w2plus = jnp.concatenate([w2p, wscp], axis=1).astype(mxu_dtype)

    pre = jnp.stack([params["pre_scale"], params["pre_bias"]], axis=1)   # (Cin, 2)
    bn1 = jnp.stack([params["bn1_scale"], params["bn1_bias"]], axis=1)   # (Cout, 2)

    # Interior mask of the padded spatial grid (zeroes the garbage border of
    # the conv1 output so it can serve as conv2's zero padding).
    hh = jnp.arange(Hp)
    ww = jnp.arange(Wp)
    interior = ((hh[:, None] >= 1) & (hh[:, None] <= H) &
                (ww[None, :] >= 1) & (ww[None, :] <= W))
    mask = interior.astype(jnp.float32).reshape(1, Lp)

    kernel = functools.partial(_residual_block_kernel, H=H, W=W,
                               mxu_dtype=mxu_dtype)

    out_pad = pl.pallas_call(
        kernel,
        out_shape=jax.ShapeDtypeStruct((N, Cout, Lp), jnp.float32),
        grid_spec=pltpu.PrefetchScalarGridSpec(
            num_scalar_prefetch=0,
            grid=(N,),
            in_specs=[
                pl.BlockSpec((1, Cin, H * W), lambda n: (n, 0, 0)),
                pl.BlockSpec((Cout, 9 * Cpi), lambda n: (0, 0)),
                pl.BlockSpec((Cout, 9 * Cpo + Cpi), lambda n: (0, 0)),
                pl.BlockSpec((Cin, 2), lambda n: (0, 0)),
                pl.BlockSpec((Cout, 2), lambda n: (0, 0)),
                pl.BlockSpec((1, Lp), lambda n: (0, 0)),
            ],
            out_specs=pl.BlockSpec((1, Cout, Lp), lambda n: (n, 0, 0)),
            scratch_shapes=[
                pltpu.VMEM((Cpi, Lext), mxu_dtype),            # p0: raw x, padded
                pltpu.VMEM((Cpi, Lext), mxu_dtype),            # p1: preact, padded
                pltpu.VMEM((Cpo, Lext), mxu_dtype),            # p2: conv1 out, padded
                pltpu.VMEM((9 * Cpi, Lp), mxu_dtype),          # im2col conv1
                pltpu.VMEM((9 * Cpo + Cpi, Lp), mxu_dtype),    # im2col conv2+shortcut
            ],
        ),
        compiler_params=pltpu.CompilerParams(
            dimension_semantics=("parallel",)),                # batch axis -> megacore
    )(x, w1p, w2plus, pre, bn1, mask)

    # Drop the 1-pixel padded border (cheap XLA slice); result is NCHW already.
    return out_pad.reshape(N, Cout, Hp, Wp)[:, :, 1:H + 1, 1:W + 1]


def _fold_bn(gamma, beta, mean, var, eps=1e-5):
    scale = gamma / jnp.sqrt(var + eps)
    bias = beta - mean * scale
    return scale, bias


def _reference_forward(x_nchw, params):
    """Pure-JAX reference of the PyTorch forward (eval-mode BN)."""
    x = jnp.transpose(x_nchw, (0, 2, 3, 1)).astype(jnp.float32)  # NHWC
    dn = ("NHWC", "HWIO", "NHWC")
    sc = jax.lax.conv_general_dilated(
        x, params["wsc"][None, None], (1, 1), "VALID", dimension_numbers=dn)
    y = jnp.maximum(x * params["pre_scale"] + params["pre_bias"], 0.0)
    c1 = jax.lax.conv_general_dilated(
        y, params["w1_hwio"], (1, 1), ((1, 1), (1, 1)), dimension_numbers=dn)
    z = jnp.maximum(c1 * params["bn1_scale"] + params["bn1_bias"], 0.0)
    c2 = jax.lax.conv_general_dilated(
        z, params["w2_hwio"], (1, 1), ((1, 1), (1, 1)), dimension_numbers=dn)
    out = c2 + sc
    return jnp.transpose(out, (0, 3, 1, 2))                      # NCHW


if __name__ == "__main__":
    # Module config: in_channels=4, base_channels=8, stride=1, dilation=1,
    # add_preact=True, add_last_norm=False -> shortcut is a 1x1 conv.
    N, Cin, H, W = 2, 4, 16, 16
    Cout = 8

    key = jax.random.PRNGKey(0)
    keys = jax.random.split(key, 10)

    x = jax.random.normal(keys[0], (N, Cin, H, W), jnp.float32)

    w1_hwio = 0.1 * jax.random.normal(keys[1], (3, 3, Cin, Cout), jnp.float32)
    w2_hwio = 0.1 * jax.random.normal(keys[2], (3, 3, Cout, Cout), jnp.float32)
    wsc = 0.1 * jax.random.normal(keys[3], (Cin, Cout), jnp.float32)

    pre_gamma = 1.0 + 0.1 * jax.random.normal(keys[4], (Cin,), jnp.float32)
    pre_beta = 0.1 * jax.random.normal(keys[5], (Cin,), jnp.float32)
    pre_mean = 0.1 * jax.random.normal(keys[6], (Cin,), jnp.float32)
    pre_var = 1.0 + 0.1 * jax.random.uniform(keys[7], (Cin,), jnp.float32)
    bn1_gamma = 1.0 + 0.1 * jax.random.normal(keys[8], (Cout,), jnp.float32)
    bn1_beta = 0.1 * jax.random.normal(keys[9], (Cout,), jnp.float32)
    bn1_mean = jnp.zeros((Cout,), jnp.float32)
    bn1_var = jnp.ones((Cout,), jnp.float32)

    pre_scale, pre_bias = _fold_bn(pre_gamma, pre_beta, pre_mean, pre_var)
    bn1_scale, bn1_bias = _fold_bn(bn1_gamma, bn1_beta, bn1_mean, bn1_var)

    params = dict(
        w1_hwio=w1_hwio, w2_hwio=w2_hwio, wsc=wsc,
        pre_scale=pre_scale, pre_bias=pre_bias,
        bn1_scale=bn1_scale, bn1_bias=bn1_bias,
    )

    ref = jax.block_until_ready(_reference_forward(x, params))

    # f32 MXU path: exactness check.
    out_f32 = jax.block_until_ready(
        preact_basic_residual_block(x, params, use_bf16_mxu=False))
    np.testing.assert_allclose(np.asarray(out_f32), np.asarray(ref),
                               rtol=1e-3, atol=1e-3)

    # bf16 MXU path (f32 accumulation): the fast path on v6e/v7x.
    out_bf16 = jax.block_until_ready(
        preact_basic_residual_block(x, params, use_bf16_mxu=True))
    np.testing.assert_allclose(np.asarray(out_bf16), np.asarray(ref),
                               rtol=5e-2, atol=5e-2)

    print("KERNEL_OK")
</pallas_src>

<mosaic_0001>
module attributes {stable_mosaic.version = 11 : i64} {
  func.func @_residual_block_kernel(%arg0: i32, %arg1: memref<1x4x256xf32, #tpu.memory_space<vmem>>, %arg2: memref<8x72xf32, #tpu.memory_space<vmem>>, %arg3: memref<8x80xf32, #tpu.memory_space<vmem>>, %arg4: memref<4x2xf32, #tpu.memory_space<vmem>>, %arg5: memref<8x2xf32, #tpu.memory_space<vmem>>, %arg6: memref<1x324xf32, #tpu.memory_space<vmem>>, %arg7: memref<1x8x324xf32, #tpu.memory_space<vmem>>, %arg8: memref<8x362xf32, #tpu.memory_space<vmem>>, %arg9: memref<8x362xf32, #tpu.memory_space<vmem>>, %arg10: memref<8x362xf32, #tpu.memory_space<vmem>>, %arg11: memref<72x324xf32, #tpu.memory_space<vmem>>, %arg12: memref<80x324xf32, #tpu.memory_space<vmem>>) attributes {dimension_semantics = [#tpu.dimension_semantics<parallel>], iteration_bounds = array<i64: 2>, scalar_prefetch = 0 : i64, scratch_operands = 5 : i64, tpu.core_type = #tpu.core_type<tc>, window_params = [{transform_indices = @transform_0, window_bounds = array<i64: 1, 4, 256>}, {pipeline_mode = #tpu.pipeline_mode<synchronous>, transform_indices = @transform_1, window_bounds = array<i64: 8, 72>}, {pipeline_mode = #tpu.pipeline_mode<synchronous>, transform_indices = @transform_2, window_bounds = array<i64: 8, 80>}, {pipeline_mode = #tpu.pipeline_mode<synchronous>, transform_indices = @transform_3, window_bounds = array<i64: 4, 2>}, {pipeline_mode = #tpu.pipeline_mode<synchronous>, transform_indices = @transform_4, window_bounds = array<i64: 8, 2>}, {pipeline_mode = #tpu.pipeline_mode<synchronous>, transform_indices = @transform_5, window_bounds = array<i64: 1, 324>}, {transform_indices = @transform_6, window_bounds = array<i64: 1, 8, 324>}]} {
    %cst = arith.constant 0.000000e+00 : f32
    %0 = vector.broadcast %cst : f32 to vector<8x362xf32>
    %c0 = arith.constant 0 : index
    %c0_0 = arith.constant 0 : index
    %1 = vector.load %arg8[%c0, %c0_0] : memref<8x362xf32, #tpu.memory_space<vmem>>, vector<8x362xf32>
    tpu.vector_store %arg8[%c0, %c0_0], %0 {strides = array<i32>} : memref<8x362xf32, #tpu.memory_space<vmem>>, vector<8x362xf32>,
    %cst_1 = arith.constant 0.000000e+00 : f32
    %2 = vector.broadcast %cst_1 : f32 to vector<8x362xf32>
    %c0_2 = arith.constant 0 : index
    %c0_3 = arith.constant 0 : index
    %3 = vector.load %arg9[%c0_2, %c0_3] : memref<8x362xf32, #tpu.memory_space<vmem>>, vector<8x362xf32>
    tpu.vector_store %arg9[%c0_2, %c0_3], %2 {strides = array<i32>} : memref<8x362xf32, #tpu.memory_space<vmem>>, vector<8x362xf32>,
    %cst_4 = arith.constant 0.000000e+00 : f32
    %4 = vector.broadcast %cst_4 : f32 to vector<8x362xf32>
    %c0_5 = arith.constant 0 : index
    %c0_6 = arith.constant 0 : index
    %5 = vector.load %arg10[%c0_5, %c0_6] : memref<8x362xf32, #tpu.memory_space<vmem>>, vector<8x362xf32>
    tpu.vector_store %arg10[%c0_5, %c0_6], %4 {strides = array<i32>} : memref<8x362xf32, #tpu.memory_space<vmem>>, vector<8x362xf32>,
    %c0_7 = arith.constant 0 : index
    %c0_8 = arith.constant 0 : index
    %c0_9 = arith.constant 0 : index
    %6 = vector.load %arg1[%c0_7, %c0_8, %c0_9] : memref<1x4x256xf32, #tpu.memory_space<vmem>>, vector<1x4x256xf32>
    %7 = vector.shape_cast %6 : vector<1x4x256xf32> to vector<4x256xf32>
    %c0_10 = arith.constant 0 : index
    %c0_11 = arith.constant 0 : index
    %8 = vector.load %arg4[%c0_10, %c0_11] : memref<4x2xf32, #tpu.memory_space<vmem>>, vector<4x1xf32>
    %9 = vector.broadcast %8 : vector<4x1xf32> to vector<4x256xf32>
    %10 = arith.mulf %7, %9 : vector<4x256xf32>
    %c0_12 = arith.constant 0 : index
    %c1 = arith.constant 1 : index
    %11 = vector.load %arg4[%c0_12, %c1] : memref<4x2xf32, #tpu.memory_space<vmem>>, vector<4x1xf32>
    %12 = vector.broadcast %11 : vector<4x1xf32> to vector<4x256xf32>
    %13 = arith.addf %10, %12 : vector<4x256xf32>
    %cst_13 = arith.constant 0.000000e+00 : f32
    %14 = vector.broadcast %cst_13 : f32 to vector<4x256xf32>
    %15 = arith.maximumf %13, %14 : vector<4x256xf32>
    %16 = vector.extract_strided_slice %7 {offsets = [0, 0], sizes = [4, 16], strides = [1, 1]} : vector<4x256xf32> to vector<4x16xf32>
    %c0_14 = arith.constant 0 : index
    %c38 = arith.constant 38 : index
    %17 = vector.load %arg8[%c0_14, %c38] : memref<8x362xf32, #tpu.memory_space<vmem>>, vector<4x16xf32>
    tpu.vector_store %arg8[%c0_14, %c38], %16 {strides = array<i32>} : memref<8x362xf32, #tpu.memory_space<vmem>>, vector<4x16xf32>,
    %18 = vector.extract_strided_slice %15 {offsets = [0, 0], sizes = [4, 16], strides = [1, 1]} : vector<4x256xf32> to vector<4x16xf32>
    %c0_15 = arith.constant 0 : index
    %c38_16 = arith.constant 38 : index
    %19 = vector.load %arg9[%c0_15, %c38_16] : memref<8x362xf32, #tpu.memory_space<vmem>>, vector<4x16xf32>
    tpu.vector_store %arg9[%c0_15, %c38_16], %18 {strides = array<i32>} : memref<8x362xf32, #tpu.memory_space<vmem>>, vector<4x16xf32>,
    %20 = vector.extract_strided_slice %7 {offsets = [0, 16], sizes = [4, 16], strides = [1, 1]} : vector<4x256xf32> to vector<4x16xf32>
    %c0_17 = arith.constant 0 : index
    %c56 = arith.constant 56 : index
    %21 = vector.load %arg8[%c0_17, %c56] : memref<8x362xf32, #tpu.memory_space<vmem>>, vector<4x16xf32>
    tpu.vector_store %arg8[%c0_17, %c56], %20 {strides = array<i32>} : memref<8x362xf32, #tpu.memory_space<vmem>>, vector<4x16xf32>,
    %22 = vector.extract_strided_slice %15 {offsets = [0, 16], sizes = [4, 16], strides = [1, 1]} : vector<4x256xf32> to vector<4x16xf32>
    %c0_18 = arith.constant 0 : index
    %c56_19 = arith.constant 56 : index
    %23 = vector.load %arg9[%c0_18, %c56_19] : memref<8x362xf32, #tpu.memory_space<vmem>>, vector<4x16xf32>
    tpu.vector_store %arg9[%c0_18, %c56_19], %22 {strides = array<i32>} : memref<8x362xf32, #tpu.memory_space<vmem>>, vector<4x16xf32>,
    %24 = vector.extract_strided_slice %7 {offsets = [0, 32], sizes = [4, 16], strides = [1, 1]} : vector<4x256xf32> to vector<4x16xf32>
    %c0_20 = arith.constant 0 : index
    %c74 = arith.constant 74 : index
    %25 = vector.load %arg8[%c0_20, %c74] : memref<8x362xf32, #tpu.memory_space<vmem>>, vector<4x16xf32>
    tpu.vector_store %arg8[%c0_20, %c74], %24 {strides = array<i32>} : memref<8x362xf32, #tpu.memory_space<vmem>>, vector<4x16xf32>,
    %26 = vector.extract_strided_slice %15 {offsets = [0, 32], sizes = [4, 16], strides = [1, 1]} : vector<4x256xf32> to vector<4x16xf32>
    %c0_21 = arith.constant 0 : index
    %c74_22 = arith.constant 74 : index
    %27 = vector.load %arg9[%c0_21, %c74_22] : memref<8x362xf32, #tpu.memory_space<vmem>>, vector<4x16xf32>
    tpu.vector_store %arg9[%c0_21, %c74_22], %26 {strides = array<i32>} : memref<8x362xf32, #tpu.memory_space<vmem>>, vector<4x16xf32>,
    %28 = vector.extract_strided_slice %7 {offsets = [0, 48], sizes = [4, 16], strides = [1, 1]} : vector<4x256xf32> to vector<4x16xf32>
    %c0_23 = arith.constant 0 : index
    %c92 = arith.constant 92 : index
    %29 = vector.load %arg8[%c0_23, %c92] : memref<8x362xf32, #tpu.memory_space<vmem>>, vector<4x16xf32>
    tpu.vector_store %arg8[%c0_23, %c92], %28 {strides = array<i32>} : memref<8x362xf32, #tpu.memory_space<vmem>>, vector<4x16xf32>,
    %30 = vector.extract_strided_slice %15 {offsets = [0, 48], sizes = [4, 16], strides = [1, 1]} : vector<4x256xf32> to vector<4x16xf32>
    %c0_24 = arith.constant 0 : index
    %c92_25 = arith.constant 92 : index
    %31 = vector.load %arg9[%c0_24, %c92_25] : memref<8x362xf32, #tpu.memory_space<vmem>>, vector<4x16xf32>
    tpu.vector_store %arg9[%c0_24, %c92_25], %30 {strides = array<i32>} : memref<8x362xf32, #tpu.memory_space<vmem>>, vector<4x16xf32>,
    %32 = vector.extract_strided_slice %7 {offsets = [0, 64], sizes = [4, 16], strides = [1, 1]} : vector<4x256xf32> to vector<4x16xf32>
    %c0_26 = arith.constant 0 : index
    %c110 = arith.constant 110 : index
    %33 = vector.load %arg8[%c0_26, %c110] : memref<8x362xf32, #tpu.memory_space<vmem>>, vector<4x16xf32>
    tpu.vector_store %arg8[%c0_26, %c110], %32 {strides = array<i32>} : memref<8x362xf32, #tpu.memory_space<vmem>>, vector<4x16xf32>,
    %34 = vector.extract_strided_slice %15 {offsets = [0, 64], sizes = [4, 16], strides = [1, 1]} : vector<4x256xf32> to vector<4x16xf32>
    %c0_27 = arith.constant 0 : index
    %c110_28 = arith.constant 110 : index
    %35 = vector.load %arg9[%c0_27, %c110_28] : memref<8x362xf32, #tpu.memory_space<vmem>>, vector<4x16xf32>
    tpu.vector_store %arg9[%c0_27, %c110_28], %34 {strides = array<i32>} : memref<8x362xf32, #tpu.memory_space<vmem>>, vector<4x16xf32>,
    %36 = vector.extract_strided_slice %7 {offsets = [0, 80], sizes = [4, 16], strides = [1, 1]} : vector<4x256xf32> to vector<4x16xf32>
    %c0_29 = arith.constant 0 : index
    %c128 = arith.constant 128 : index
    %37 = vector.load %arg8[%c0_29, %c128] : memref<8x362xf32, #tpu.memory_space<vmem>>, vector<4x16xf32>
    tpu.vector_store %arg8[%c0_29, %c128], %36 {strides = array<i32>} : memref<8x362xf32, #tpu.memory_space<vmem>>, vector<4x16xf32>,
    %38 = vector.extract_strided_slice %15 {offsets = [0, 80], sizes = [4, 16], strides = [1, 1]} : vector<4x256xf32> to vector<4x16xf32>
    %c0_30 = arith.constant 0 : index
    %c128_31 = arith.constant 128 : index
    %39 = vector.load %arg9[%c0_30, %c128_31] : memref<8x362xf32, #tpu.memory_space<vmem>>, vector<4x16xf32>
    tpu.vector_store %arg9[%c0_30, %c128_31], %38 {strides = array<i32>} : memref<8x362xf32, #tpu.memory_space<vmem>>, vector<4x16xf32>,
    %40 = vector.extract_strided_slice %7 {offsets = [0, 96], sizes = [4, 16], strides = [1, 1]} : vector<4x256xf32> to vector<4x16xf32>
    %c0_32 = arith.constant 0 : index
    %c146 = arith.constant 146 : index
    %41 = vector.load %arg8[%c0_32, %c146] : memref<8x362xf32, #tpu.memory_space<vmem>>, vector<4x16xf32>
    tpu.vector_store %arg8[%c0_32, %c146], %40 {strides = array<i32>} : memref<8x362xf32, #tpu.memory_space<vmem>>, vector<4x16xf32>,
    %42 = vector.extract_strided_slice %15 {offsets = [0, 96], sizes = [4, 16], strides = [1, 1]} : vector<4x256xf32> to vector<4x16xf32>
    %c0_33 = arith.constant 0 : index
    %c146_34 = arith.constant 146 : index
    %43 = vector.load %arg9[%c0_33, %c146_34] : memref<8x362xf32, #tpu.memory_space<vmem>>, vector<4x16xf32>
    tpu.vector_store %arg9[%c0_33, %c146_34], %42 {strides = array<i32>} : memref<8x362xf32, #tpu.memory_space<vmem>>, vector<4x16xf32>,
    %44 = vector.extract_strided_slice %7 {offsets = [0, 112], sizes = [4, 16], strides = [1, 1]} : vector<4x256xf32> to vector<4x16xf32>
    %c0_35 = arith.constant 0 : index
    %c164 = arith.constant 164 : index
    %45 = vector.load %arg8[%c0_35, %c164] : memref<8x362xf32, #tpu.memory_space<vmem>>, vector<4x16xf32>
    tpu.vector_store %arg8[%c0_35, %c164], %44 {strides = array<i32>} : memref<8x362xf32, #tpu.memory_space<vmem>>, vector<4x16xf32>,
    %46 = vector.extract_strided_slice %15 {offsets = [0, 112], sizes = [4, 16], strides = [1, 1]} : vector<4x256xf32> to vector<4x16xf32>
    %c0_36 = arith.constant 0 : index
    %c164_37 = arith.constant 164 : index
    %47 = vector.load %arg9[%c0_36, %c164_37] : memref<8x362xf32, #tpu.memory_space<vmem>>, vector<4x16xf32>
    tpu.vector_store %arg9[%c0_36, %c164_37], %46 {strides = array<i32>} : memref<8x362xf32, #tpu.memory_space<vmem>>, vector<4x16xf32>,
    %48 = vector.extract_strided_slice %7 {offsets = [0, 128], sizes = [4, 16], strides = [1, 1]} : vector<4x256xf32> to vector<4x16xf32>
    %c0_38 = arith.constant 0 : index
    %c182 = arith.constant 182 : index
    %49 = vector.load %arg8[%c0_38, %c182] : memref<8x362xf32, #tpu.memory_space<vmem>>, vector<4x16xf32>
    tpu.vector_store %arg8[%c0_38, %c182], %48 {strides = array<i32>} : memref<8x362xf32, #tpu.memory_space<vmem>>, vector<4x16xf32>,
    %50 = vector.extract_strided_slice %15 {offsets = [0, 128], sizes = [4, 16], strides = [1, 1]} : vector<4x256xf32> to vector<4x16xf32>
    %c0_39 = arith.constant 0 : index
    %c182_40 = arith.constant 182 : index
    %51 = vector.load %arg9[%c0_39, %c182_40] : memref<8x362xf32, #tpu.memory_space<vmem>>, vector<4x16xf32>
    tpu.vector_store %arg9[%c0_39, %c182_40], %50 {strides = array<i32>} : memref<8x362xf32, #tpu.memory_space<vmem>>, vector<4x16xf32>,
    %52 = vector.extract_strided_slice %7 {offsets = [0, 144], sizes = [4, 16], strides = [1, 1]} : vector<4x256xf32> to vector<4x16xf32>
    %c0_41 = arith.constant 0 : index
    %c200 = arith.constant 200 : index
    %53 = vector.load %arg8[%c0_41, %c200] : memref<8x362xf32, #tpu.memory_space<vmem>>, vector<4x16xf32>
    tpu.vector_store %arg8[%c0_41, %c200], %52 {strides = array<i32>} : memref<8x362xf32, #tpu.memory_space<vmem>>, vector<4x16xf32>,
    %54 = vector.extract_strided_slice %15 {offsets = [0, 144], sizes = [4, 16], strides = [1, 1]} : vector<4x256xf32> to vector<4x16xf32>
    %c0_42 = arith.constant 0 : index
    %c200_43 = arith.constant 200 : index
    %55 = vector.load %arg9[%c0_42, %c200_43] : memref<8x362xf32, #tpu.memory_space<vmem>>, vector<4x16xf32>
    tpu.vector_store %arg9[%c0_42, %c200_43], %54 {strides = array<i32>} : memref<8x362xf32, #tpu.memory_space<vmem>>, vector<4x16xf32>,
    %56 = vector.extract_strided_slice %7 {offsets = [0, 160], sizes = [4, 16], strides = [1, 1]} : vector<4x256xf32> to vector<4x16xf32>
    %c0_44 = arith.constant 0 : index
    %c218 = arith.constant 218 : index
    %57 = vector.load %arg8[%c0_44, %c218] : memref<8x362xf32, #tpu.memory_space<vmem>>, vector<4x16xf32>
    tpu.vector_store %arg8[%c0_44, %c218], %56 {strides = array<i32>} : memref<8x362xf32, #tpu.memory_space<vmem>>, vector<4x16xf32>,
    %58 = vector.extract_strided_slice %15 {offsets = [0, 160], sizes = [4, 16], strides = [1, 1]} : vector<4x256xf32> to vector<4x16xf32>
    %c0_45 = arith.constant 0 : index
    %c218_46 = arith.constant 218 : index
    %59 = vector.load %arg9[%c0_45, %c218_46] : memref<8x362xf32, #tpu.memory_space<vmem>>, vector<4x16xf32>
    tpu.vector_store %arg9[%c0_45, %c218_46], %58 {strides = array<i32>} : memref<8x362xf32, #tpu.memory_space<vmem>>, vector<4x16xf32>,
    %60 = vector.extract_strided_slice %7 {offsets = [0, 176], sizes = [4, 16], strides = [1, 1]} : vector<4x256xf32> to vector<4x16xf32>
    %c0_47 = arith.constant 0 : index
    %c236 = arith.constant 236 : index
    %61 = vector.load %arg8[%c0_47, %c236] : memref<8x362xf32, #tpu.memory_space<vmem>>, vector<4x16xf32>
    tpu.vector_store %arg8[%c0_47, %c236], %60 {strides = array<i32>} : memref<8x362xf32, #tpu.memory_space<vmem>>, vector<4x16xf32>,
    %62 = vector.extract_strided_slice %15 {offsets = [0, 176], sizes = [4, 16], strides = [1, 1]} : vector<4x256xf32> to vector<4x16xf32>
    %c0_48 = arith.constant 0 : index
    %c236_49 = arith.constant 236 : index
    %63 = vector.load %arg9[%c0_48, %c236_49] : memref<8x362xf32, #tpu.memory_space<vmem>>, vector<4x16xf32>
    tpu.vector_store %arg9[%c0_48, %c236_49], %62 {strides = array<i32>} : memref<8x362xf32, #tpu.memory_space<vmem>>, vector<4x16xf32>,
    %64 = vector.extract_strided_slice %7 {offsets = [0, 192], sizes = [4, 16], strides = [1, 1]} : vector<4x256xf32> to vector<4x16xf32>
    %c0_50 = arith.constant 0 : index
    %c254 = arith.constant 254 : index
    %65 = vector.load %arg8[%c0_50, %c254] : memref<8x362xf32, #tpu.memory_space<vmem>>, vector<4x16xf32>
    tpu.vector_store %arg8[%c0_50, %c254], %64 {strides = array<i32>} : memref<8x362xf32, #tpu.memory_space<vmem>>, vector<4x16xf32>,
    %66 = vector.extract_strided_slice %15 {offsets = [0, 192], sizes = [4, 16], strides = [1, 1]} : vector<4x256xf32> to vector<4x16xf32>
    %c0_51 = arith.constant 0 : index
    %c254_52 = arith.constant 254 : index
    %67 = vector.load %arg9[%c0_51, %c254_52] : memref<8x362xf32, #tpu.memory_space<vmem>>, vector<4x16xf32>
    tpu.vector_store %arg9[%c0_51, %c254_52], %66 {strides = array<i32>} : memref<8x362xf32, #tpu.memory_space<vmem>>, vector<4x16xf32>,
    %68 = vector.extract_strided_slice %7 {offsets = [0, 208], sizes = [4, 16], strides = [1, 1]} : vector<4x256xf32> to vector<4x16xf32>
    %c0_53 = arith.constant 0 : index
    %c272 = arith.constant 272 : index
    %69 = vector.load %arg8[%c0_53, %c272] : memref<8x362xf32, #tpu.memory_space<vmem>>, vector<4x16xf32>
    tpu.vector_store %arg8[%c0_53, %c272], %68 {strides = array<i32>} : memref<8x362xf32, #tpu.memory_space<vmem>>, vector<4x16xf32>,
    %70 = vector.extract_strided_slice %15 {offsets = [0, 208], sizes = [4, 16], strides = [1, 1]} : vector<4x256xf32> to vector<4x16xf32>
    %c0_54 = arith.constant 0 : index
    %c272_55 = arith.constant 272 : index
    %71 = vector.load %arg9[%c0_54, %c272_55] : memref<8x362xf32, #tpu.memory_space<vmem>>, vector<4x16xf32>
    tpu.vector_store %arg9[%c0_54, %c272_55], %70 {strides = array<i32>} : memref<8x362xf32, #tpu.memory_space<vmem>>, vector<4x16xf32>,
    %72 = vector.extract_strided_slice %7 {offsets = [0, 224], sizes = [4, 16], strides = [1, 1]} : vector<4x256xf32> to vector<4x16xf32>
    %c0_56 = arith.constant 0 : index
    %c290 = arith.constant 290 : index
    %73 = vector.load %arg8[%c0_56, %c290] : memref<8x362xf32, #tpu.memory_space<vmem>>, vector<4x16xf32>
    tpu.vector_store %arg8[%c0_56, %c290], %72 {strides = array<i32>} : memref<8x362xf32, #tpu.memory_space<vmem>>, vector<4x16xf32>,
    %74 = vector.extract_strided_slice %15 {offsets = [0, 224], sizes = [4, 16], strides = [1, 1]} : vector<4x256xf32> to vector<4x16xf32>
    %c0_57 = arith.constant 0 : index
    %c290_58 = arith.constant 290 : index
    %75 = vector.load %arg9[%c0_57, %c290_58] : memref<8x362xf32, #tpu.memory_space<vmem>>, vector<4x16xf32>
    tpu.vector_store %arg9[%c0_57, %c290_58], %74 {strides = array<i32>} : memref<8x362xf32, #tpu.memory_space<vmem>>, vector<4x16xf32>,
    %76 = vector.extract_strided_slice %7 {offsets = [0, 240], sizes = [4, 16], strides = [1, 1]} : vector<4x256xf32> to vector<4x16xf32>
    %c0_59 = arith.constant 0 : index
    %c308 = arith.constant 308 : index
    %77 = vector.load %arg8[%c0_59, %c308] : memref<8x362xf32, #tpu.memory_space<vmem>>, vector<4x16xf32>
    tpu.vector_store %arg8[%c0_59, %c308], %76 {strides = array<i32>} : memref<8x362xf32, #tpu.memory_space<vmem>>, vector<4x16xf32>,
    %78 = vector.extract_strided_slice %15 {offsets = [0, 240], sizes = [4, 16], strides = [1, 1]} : vector<4x256xf32> to vector<4x16xf32>
    %c0_60 = arith.constant 0 : index
    %c308_61 = arith.constant 308 : index
    %79 = vector.load %arg9[%c0_60, %c308_61] : memref<8x362xf32, #tpu.memory_space<vmem>>, vector<4x16xf32>
    tpu.vector_store %arg9[%c0_60, %c308_61], %78 {strides = array<i32>} : memref<8x362xf32, #tpu.memory_space<vmem>>, vector<4x16xf32>,
    %c0_62 = arith.constant 0 : index
    %c0_63 = arith.constant 0 : index
    %80 = vector.load %arg9[%c0_62, %c0_63] : memref<8x362xf32, #tpu.memory_space<vmem>>, vector<8x324xf32>
    %c0_64 = arith.constant 0 : index
    %c0_65 = arith.constant 0 : index
    %81 = vector.load %arg11[%c0_64, %c0_65] : memref<72x324xf32, #tpu.memory_space<vmem>>, vector<8x324xf32>
    tpu.vector_store %arg11[%c0_64, %c0_65], %80 {strides = array<i32>} : memref<72x324xf32, #tpu.memory_space<vmem>>, vector<8x324xf32>,
    %c0_66 = arith.constant 0 : index
    %c1_67 = arith.constant 1 : index
    %82 = vector.load %arg9[%c0_66, %c1_67] : memref<8x362xf32, #tpu.memory_space<vmem>>, vector<8x324xf32>
    %c8 = arith.constant 8 : index
    %c0_68 = arith.constant 0 : index
    %83 = vector.load %arg11[%c8, %c0_68] : memref<72x324xf32, #tpu.memory_space<vmem>>, vector<8x324xf32>
    tpu.vector_store %arg11[%c8, %c0_68], %82 {strides = array<i32>} : memref<72x324xf32, #tpu.memory_space<vmem>>, vector<8x324xf32>,
    %c0_69 = arith.constant 0 : index
    %c2 = arith.constant 2 : index
    %84 = vector.load %arg9[%c0_69, %c2] : memref<8x362xf32, #tpu.memory_space<vmem>>, vector<8x324xf32>
    %c16 = arith.constant 16 : index
    %c0_70 = arith.constant 0 : index
    %85 = vector.load %arg11[%c16, %c0_70] : memref<72x324xf32, #tpu.memory_space<vmem>>, vector<8x324xf32>
    tpu.vector_store %arg11[%c16, %c0_70], %84 {strides = array<i32>} : memref<72x324xf32, #tpu.memory_space<vmem>>, vector<8x324xf32>,
    %c0_71 = arith.constant 0 : index
    %c18 = arith.constant 18 : index
    %86 = vector.load %arg9[%c0_71, %c18] : memref<8x362xf32, #tpu.memory_space<vmem>>, vector<8x324xf32>
    %c24 = arith.constant 24 : index
    %c0_72 = arith.constant 0 : index
    %87 = vector.load %arg11[%c24, %c0_72] : memref<72x324xf32, #tpu.memory_space<vmem>>, vector<8x324xf32>
    tpu.vector_store %arg11[%c24, %c0_72], %86 {strides = array<i32>} : memref<72x324xf32, #tpu.memory_space<vmem>>, vector<8x324xf32>,
    %c0_73 = arith.constant 0 : index
    %c19 = arith.constant 19 : index
    %88 = vector.load %arg9[%c0_73, %c19] : memref<8x362xf32, #tpu.memory_space<vmem>>, vector<8x324xf32>
    %c32 = arith.constant 32 : index
    %c0_74 = arith.constant 0 : index
    %89 = vector.load %arg11[%c32, %c0_74] : memref<72x324xf32, #tpu.memory_space<vmem>>, vector<8x324xf32>
    tpu.vector_store %arg11[%c32, %c0_74], %88 {strides = array<i32>} : memref<72x324xf32, #tpu.memory_space<vmem>>, vector<8x324xf32>,
    %c0_75 = arith.constant 0 : index
    %c20 = arith.constant 20 : index
    %90 = vector.load %arg9[%c0_75, %c20] : memref<8x362xf32, #tpu.memory_space<vmem>>, vector<8x324xf32>
    %c40 = arith.constant 40 : index
    %c0_76 = arith.constant 0 : index
    %91 = vector.load %arg11[%c40, %c0_76] : memref<72x324xf32, #tpu.memory_space<vmem>>, vector<8x324xf32>
    tpu.vector_store %arg11[%c40, %c0_76], %90 {strides = array<i32>} : memref<72x324xf32, #tpu.memory_space<vmem>>, vector<8x324xf32>,
    %c0_77 = arith.constant 0 : index
    %c36 = arith.constant 36 : index
    %92 = vector.load %arg9[%c0_77, %c36] : memref<8x362xf32, #tpu.memory_space<vmem>>, vector<8x324xf32>
    %c48 = arith.constant 48 : index
    %c0_78 = arith.constant 0 : index
    %93 = vector.load %arg11[%c48, %c0_78] : memref<72x324xf32, #tpu.memory_space<vmem>>, vector<8x324xf32>
    tpu.vector_store %arg11[%c48, %c0_78], %92 {strides = array<i32>} : memref<72x324xf32, #tpu.memory_space<vmem>>, vector<8x324xf32>,
    %c0_79 = arith.constant 0 : index
    %c37 = arith.constant 37 : index
    %94 = vector.load %arg9[%c0_79, %c37] : memref<8x362xf32, #tpu.memory_space<vmem>>, vector<8x324xf32>
    %c56_80 = arith.constant 56 : index
    %c0_81 = arith.constant 0 : index
    %95 = vector.load %arg11[%c56_80, %c0_81] : memref<72x324xf32, #tpu.memory_space<vmem>>, vector<8x324xf32>
    tpu.vector_store %arg11[%c56_80, %c0_81], %94 {strides = array<i32>} : memref<72x324xf32, #tpu.memory_space<vmem>>, vector<8x324xf32>,
    %c0_82 = arith.constant 0 : index
    %c38_83 = arith.constant 38 : index
    %96 = vector.load %arg9[%c0_82, %c38_83] : memref<8x362xf32, #tpu.memory_space<vmem>>, vector<8x324xf32>
    %c64 = arith.constant 64 : index
    %c0_84 = arith.constant 0 : index
    %97 = vector.load %arg11[%c64, %c0_84] : memref<72x324xf32, #tpu.memory_space<vmem>>, vector<8x324xf32>
    tpu.vector_store %arg11[%c64, %c0_84], %96 {strides = array<i32>} : memref<72x324xf32, #tpu.memory_space<vmem>>, vector<8x324xf32>,
    %c0_85 = arith.constant 0 : index
    %c0_86 = arith.constant 0 : index
    %98 = vector.load %arg2[%c0_85, %c0_86] : memref<8x72xf32, #tpu.memory_space<vmem>>, vector<8x72xf32>
    %c0_87 = arith.constant 0 : index
    %c0_88 = arith.constant 0 : index
    %99 = vector.load %arg11[%c0_87, %c0_88] : memref<72x324xf32, #tpu.memory_space<vmem>>, vector<72x324xf32>
    %cst_89 = arith.constant dense<0.000000e+00> : vector<8x324xf32>
    %100 = tpu.matmul %98, %99, %cst_89 {dimension_numbers = #tpu.dot_dimension_numbers<[1], [0], [0], [1], [0, 0, 1, 1], [], []>} : vector<8x72xf32>, vector<72x324xf32>, vector<8x324xf32> -> vector<8x324xf32>
    %c0_90 = arith.constant 0 : index
    %c0_91 = arith.constant 0 : index
    %101 = vector.load %arg5[%c0_90, %c0_91] : memref<8x2xf32, #tpu.memory_space<vmem>>, vector<8x1xf32>
    %102 = vector.broadcast %101 : vector<8x1xf32> to vector<8x324xf32>
    %103 = arith.mulf %100, %102 : vector<8x324xf32>
    %c0_92 = arith.constant 0 : index
    %c1_93 = arith.constant 1 : index
    %104 = vector.load %arg5[%c0_92, %c1_93] : memref<8x2xf32, #tpu.memory_space<vmem>>, vector<8x1xf32>
    %105 = vector.broadcast %104 : vector<8x1xf32> to vector<8x324xf32>
    %106 = arith.addf %103, %105 : vector<8x324xf32>
    %cst_94 = arith.constant 0.000000e+00 : f32
    %107 = vector.broadcast %cst_94 : f32 to vector<8x324xf32>
    %108 = arith.maximumf %106, %107 : vector<8x324xf32>
    %c0_95 = arith.constant 0 : index
    %c0_96 = arith.constant 0 : index
    %109 = vector.load %arg6[%c0_95, %c0_96] : memref<1x324xf32, #tpu.memory_space<vmem>>, vector<1x324xf32>
    %110 = vector.broadcast %109 : vector<1x324xf32> to vector<8x324xf32>
    %111 = arith.mulf %108, %110 : vector<8x324xf32>
    %c0_97 = arith.constant 0 : index
    %c19_98 = arith.constant 19 : index
    %112 = vector.load %arg10[%c0_97, %c19_98] : memref<8x362xf32, #tpu.memory_space<vmem>>, vector<8x324xf32>
    tpu.vector_store %arg10[%c0_97, %c19_98], %111 {strides = array<i32>} : memref<8x362xf32, #tpu.memory_space<vmem>>, vector<8x324xf32>,
    %c0_99 = arith.constant 0 : index
    %c0_100 = arith.constant 0 : index
    %113 = vector.load %arg10[%c0_99, %c0_100] : memref<8x362xf32, #tpu.memory_space<vmem>>, vector<8x324xf32>
    %c0_101 = arith.constant 0 : index
    %c0_102 = arith.constant 0 : index
    %114 = vector.load %arg12[%c0_101, %c0_102] : memref<80x324xf32, #tpu.memory_space<vmem>>, vector<8x324xf32>
    tpu.vector_store %arg12[%c0_101, %c0_102], %113 {strides = array<i32>} : memref<80x324xf32, #tpu.memory_space<vmem>>, vector<8x324xf32>,
    %c0_103 = arith.constant 0 : index
    %c1_104 = arith.constant 1 : index
    %115 = vector.load %arg10[%c0_103, %c1_104] : memref<8x362xf32, #tpu.memory_space<vmem>>, vector<8x324xf32>
    %c8_105 = arith.constant 8 : index
    %c0_106 = arith.constant 0 : index
    %116 = vector.load %arg12[%c8_105, %c0_106] : memref<80x324xf32, #tpu.memory_space<vmem>>, vector<8x324xf32>
    tpu.vector_store %arg12[%c8_105, %c0_106], %115 {strides = array<i32>} : memref<80x324xf32, #tpu.memory_space<vmem>>, vector<8x324xf32>,
    %c0_107 = arith.constant 0 : index
    %c2_108 = arith.constant 2 : index
    %117 = vector.load %arg10[%c0_107, %c2_108] : memref<8x362xf32, #tpu.memory_space<vmem>>, vector<8x324xf32>
    %c16_109 = arith.constant 16 : index
    %c0_110 = arith.constant 0 : index
    %118 = vector.load %arg12[%c16_109, %c0_110] : memref<80x324xf32, #tpu.memory_space<vmem>>, vector<8x324xf32>
    tpu.vector_store %arg12[%c16_109, %c0_110], %117 {strides = array<i32>} : memref<80x324xf32, #tpu.memory_space<vmem>>, vector<8x324xf32>,
    %c0_111 = arith.constant 0 : index
    %c18_112 = arith.constant 18 : index
    %119 = vector.load %arg10[%c0_111, %c18_112] : memref<8x362xf32, #tpu.memory_space<vmem>>, vector<8x324xf32>
    %c24_113 = arith.constant 24 : index
    %c0_114 = arith.constant 0 : index
    %120 = vector.load %arg12[%c24_113, %c0_114] : memref<80x324xf32, #tpu.memory_space<vmem>>, vector<8x324xf32>
    tpu.vector_store %arg12[%c24_113, %c0_114], %119 {strides = array<i32>} : memref<80x324xf32, #tpu.memory_space<vmem>>, vector<8x324xf32>,
    %c0_115 = arith.constant 0 : index
    %c19_116 = arith.constant 19 : index
    %121 = vector.load %arg10[%c0_115, %c19_116] : memref<8x362xf32, #tpu.memory_space<vmem>>, vector<8x324xf32>
    %c32_117 = arith.constant 32 : index
    %c0_118 = arith.constant 0 : index
    %122 = vector.load %arg12[%c32_117, %c0_118] : memref<80x324xf32, #tpu.memory_space<vmem>>, vector<8x324xf32>
    tpu.vector_store %arg12[%c32_117, %c0_118], %121 {strides = array<i32>} : memref<80x324xf32, #tpu.memory_space<vmem>>, vector<8x324xf32>,
    %c0_119 = arith.constant 0 : index
    %c20_120 = arith.constant 20 : index
    %123 = vector.load %arg10[%c0_119, %c20_120] : memref<8x362xf32, #tpu.memory_space<vmem>>, vector<8x324xf32>
    %c40_121 = arith.constant 40 : index
    %c0_122 = arith.constant 0 : index
    %124 = vector.load %arg12[%c40_121, %c0_122] : memref<80x324xf32, #tpu.memory_space<vmem>>, vector<8x324xf32>
    tpu.vector_store %arg12[%c40_121, %c0_122], %123 {strides = array<i32>} : memref<80x324xf32, #tpu.memory_space<vmem>>, vector<8x324xf32>,
    %c0_123 = arith.constant 0 : index
    %c36_124 = arith.constant 36 : index
    %125 = vector.load %arg10[%c0_123, %c36_124] : memref<8x362xf32, #tpu.memory_space<vmem>>, vector<8x324xf32>
    %c48_125 = arith.constant 48 : index
    %c0_126 = arith.constant 0 : index
    %126 = vector.load %arg12[%c48_125, %c0_126] : memref<80x324xf32, #tpu.memory_space<vmem>>, vector<8x324xf32>
    tpu.vector_store %arg12[%c48_125, %c0_126], %125 {strides = array<i32>} : memref<80x324xf32, #tpu.memory_space<vmem>>, vector<8x324xf32>,
    %c0_127 = arith.constant 0 : index
    %c37_128 = arith.constant 37 : index
    %127 = vector.load %arg10[%c0_127, %c37_128] : memref<8x362xf32, #tpu.memory_space<vmem>>, vector<8x324xf32>
    %c56_129 = arith.constant 56 : index
    %c0_130 = arith.constant 0 : index
    %128 = vector.load %arg12[%c56_129, %c0_130] : memref<80x324xf32, #tpu.memory_space<vmem>>, vector<8x324xf32>
    tpu.vector_store %arg12[%c56_129, %c0_130], %127 {strides = array<i32>} : memref<80x324xf32, #tpu.memory_space<vmem>>, vector<8x324xf32>,
    %c0_131 = arith.constant 0 : index
    %c38_132 = arith.constant 38 : index
    %129 = vector.load %arg10[%c0_131, %c38_132] : memref<8x362xf32, #tpu.memory_space<vmem>>, vector<8x324xf32>
    %c64_133 = arith.constant 64 : index
    %c0_134 = arith.constant 0 : index
    %130 = vector.load %arg12[%c64_133, %c0_134] : memref<80x324xf32, #tpu.memory_space<vmem>>, vector<8x324xf32>
    tpu.vector_store %arg12[%c64_133, %c0_134], %129 {strides = array<i32>} : memref<80x324xf32, #tpu.memory_space<vmem>>, vector<8x324xf32>,
    %c0_135 = arith.constant 0 : index
    %c19_136 = arith.constant 19 : index
    %131 = vector.load %arg8[%c0_135, %c19_136] : memref<8x362xf32, #tpu.memory_space<vmem>>, vector<8x324xf32>
    %c72 = arith.constant 72 : index
    %c0_137 = arith.constant 0 : index
    %132 = vector.load %arg12[%c72, %c0_137] : memref<80x324xf32, #tpu.memory_space<vmem>>, vector<8x324xf32>
    tpu.vector_store %arg12[%c72, %c0_137], %131 {strides = array<i32>} : memref<80x324xf32, #tpu.memory_space<vmem>>, vector<8x324xf32>,
    %c0_138 = arith.constant 0 : index
    %c0_139 = arith.constant 0 : index
    %133 = vector.load %arg3[%c0_138, %c0_139] : memref<8x80xf32, #tpu.memory_space<vmem>>, vector<8x80xf32>
    %c0_140 = arith.constant 0 : index
    %c0_141 = arith.constant 0 : index
    %134 = vector.load %arg12[%c0_140, %c0_141] : memref<80x324xf32, #tpu.memory_space<vmem>>, vector<80x324xf32>
    %cst_142 = arith.constant dense<0.000000e+00> : vector<8x324xf32>
    %135 = tpu.matmul %133, %134, %cst_142 {dimension_numbers = #tpu.dot_dimension_numbers<[1], [0], [0], [1], [0, 0, 1, 1], [], []>} : vector<8x80xf32>, vector<80x324xf32>, vector<8x324xf32> -> vector<8x324xf32>
    %c0_143 = arith.constant 0 : index
    %c0_144 = arith.constant 0 : index
    %c0_145 = arith.constant 0 : index
    %136 = vector.load %arg7[%c0_143, %c0_144, %c0_145] : memref<1x8x324xf32, #tpu.memory_space<vmem>>, vector<1x8x324xf32>
    %137 = vector.shape_cast %136 : vector<1x8x324xf32> to vector<8x324xf32>
    %138 = vector.shape_cast %135 : vector<8x324xf32> to vector<1x8x324xf32>
    tpu.vector_store %arg7[%c0_143, %c0_144, %c0_145], %138 {strides = array<i32>} : memref<1x8x324xf32, #tpu.memory_space<vmem>>, vector<1x8x324xf32>,
    return
  }
  func.func @transform_0(%arg0: i32) -> (i32, i32, i32) {
    %c0_i32 = arith.constant 0 : i32
    %c0_i32_0 = arith.constant 0 : i32
    %c0_i32_1 = arith.constant 0 : i32
    return %arg0, %c0_i32, %c0_i32_0 : i32, i32, i32
  }
  func.func @transform_1(%arg0: i32) -> (i32, i32) {
    %c0_i32 = arith.constant 0 : i32
    %c0_i32_0 = arith.constant 0 : i32
    %c0_i32_1 = arith.constant 0 : i32
    return %c0_i32, %c0_i32_0 : i32, i32
  }
  func.func @transform_2(%arg0: i32) -> (i32, i32) {
    %c0_i32 = arith.constant 0 : i32
    %c0_i32_0 = arith.constant 0 : i32
    %c0_i32_1 = arith.constant 0 : i32
    return %c0_i32, %c0_i32_0 : i32, i32
  }
  func.func @transform_3(%arg0: i32) -> (i32, i32) {
    %c0_i32 = arith.constant 0 : i32
    %c0_i32_0 = arith.constant 0 : i32
    %c0_i32_1 = arith.constant 0 : i32
    return %c0_i32, %c0_i32_0 : i32, i32
  }
  func.func @transform_4(%arg0: i32) -> (i32, i32) {
    %c0_i32 = arith.constant 0 : i32
    %c0_i32_0 = arith.constant 0 : i32
    %c0_i32_1 = arith.constant 0 : i32
    return %c0_i32, %c0_i32_0 : i32, i32
  }
  func.func @transform_5(%arg0: i32) -> (i32, i32) {
    %c0_i32 = arith.constant 0 : i32
    %c0_i32_0 = arith.constant 0 : i32
    %c0_i32_1 = arith.constant 0 : i32
    return %c0_i32, %c0_i32_0 : i32, i32
  }
  func.func @transform_6(%arg0: i32) -> (i32, i32, i32) {
    %c0_i32 = arith.constant 0 : i32
    %c0_i32_0 = arith.constant 0 : i32
    %c0_i32_1 = arith.constant 0 : i32
    return %arg0, %c0_i32, %c0_i32_0 : i32, i32, i32
  }
}

</mosaic_0001>

<llo_original>
// kernel: tpu_custom_call.1
$region0: #{tpu_custom_call.1}
  #allocation0 [shape = 'u32[]', space=smem, size = 0x4, offset = 0x4, fixed_abs, tag = 'smem constant byte address 0x4 - core index']
  #allocation1 [shape = 'u32[144,128]{1,0:T(1,128)}', space=vmem, size = 0x12000, scoped, tag = 'internal scratch']
  #allocation2 [shape = 'f32[8,362]{1,0:T(8,128)}', space=vmem, size = 0x3000, scoped, tag = 'scratch operand']
  #allocation3 [shape = 'f32[8,362]{1,0:T(8,128)}', space=vmem, size = 0x3000, scoped, tag = 'scratch operand']
  #allocation4 [shape = 'f32[8,362]{1,0:T(8,128)}', space=vmem, size = 0x3000, scoped, tag = 'scratch operand']
  #allocation5 [shape = 'f32[72,324]{1,0:T(8,128)}', space=vmem, size = 0x1b000, scoped, tag = 'scratch operand']
  #allocation6 [shape = 'f32[80,324]{1,0:T(8,128)}', space=vmem, size = 0x1e000, scoped, tag = 'scratch operand']
  %s0 = inlined_call_operand.vmem [shape: f32[2,4,256], index: 0, kind: input, shape index: {}]
  %s1 = inlined_call_operand.hbm [shape: f32[8,72], index: 1, kind: input, shape index: {}]
  %s2 = inlined_call_operand.hbm [shape: f32[8,80], index: 2, kind: input, shape index: {}]
  %s3 = inlined_call_operand.vmem [shape: f32[4,2], index: 3, kind: input, shape index: {}]
  %s4 = inlined_call_operand.vmem [shape: f32[8,2], index: 4, kind: input, shape index: {}]
  %s5 = inlined_call_operand.vmem [shape: f32[1,324], index: 5, kind: input, shape index: {}]
  %s6 = inlined_call_operand.hbm [shape: f32[2,8,324], index: 6, kind: output, shape index: {}]
  %s7 = sld [smem:[#allocation0]]
  $region65: #{tpu_custom_call.1} parent=0
    _
  %s9 = ssub.s32 1, %s7
  %s10 = scalar_select 0, %s9, %s7
  $region1: #{tpu_custom_call.1} parent=0
    #allocation7 [shape = 'u8[4096]{0}', space=vmem, size = 0x1000, scoped, tag = 'input window, operand 1, single buffered']
    #allocation8 [shape = 's32[2]{0}', space=sflag, size = 0x8, scoped, tag = 'scoped memory for tpu_custom_call.1']
    #allocation9 [shape = 's32[2]{0}', space=sflag, size = 0x8, scoped, tag = 'scoped memory for tpu_custom_call.1']
    #allocation10 [shape = 'u8[4096]{0}', space=vmem, size = 0x1000, scoped, tag = 'input window, operand 2, single buffered']
    #allocation11 [shape = 's32[1]{0}', space=sflag, size = 0x4, scoped, tag = 'scoped memory for tpu_custom_call.1']
    #allocation12 [shape = 'u8[24576]{0}', space=vmem, size = 0x6000, scoped, tag = 'output window, operand 0']
    %11 = vsyncpa [#allocation8], 0
    %12 = vsyncpa [#allocation11], 0
    %13 = vsyncpa [#allocation9], 0
    %s14 = scalar_lea.sflag [#allocation9], 1
    %15 = vsyncpa %s14, 0
    loop: start=0, step=1, limit=4
    $region2: #{tpu_custom_call.1} parent=1 // loop_pre_header
      _
    $region3: #{tpu_custom_call.1} parent=1 // loop_header
      %s17 = sphi 0, %s21
      %p18 = scmp.ge.s32.totalorder %s17, 4
      %s27 = sphi 0, %s29
      %s30 = sphi 0, %s27
      %s31 = sphi 0, %s30
      %s47 = sphi 0, %s31
      %s51 = sphi 0, %s51
      %s53 = sphi 0, %s51
      %s54 = sphi 0, %s53
      %s68 = sphi 0, %s54
      %s72 = sphi 0, %s72
      %s74 = sphi 0, %s72
      %s75 = sphi 0, %s74
      %s89 = sphi 0, %s75
      %s93 = sphi 0, %s93
      %s95 = sphi 0, %s93
      %s96 = sphi 0, %s95
      %s110 = sphi 0, %s96
      %s114 = sphi 0, %s114
      %s116 = sphi 0, %s114
      %s117 = sphi 0, %s116
      %s131 = sphi 0, %s117
      %s135 = sphi 0, %s135
      %s137 = sphi 0, %s135
      %s138 = sphi 0, %s137
      %s152 = sphi 0, %s138
      %s158 = sphi 0, %s160
      %s161 = sphi 0, %s158
      %s162 = sphi 0, %s161
      %s178 = sphi 0, %s162
    $region4: #{tpu_custom_call.1} parent=1 // loop_header_branch
      %20 = sbr.rel (%p18) target = $region8
    $region5: #{tpu_custom_call.1} parent=1 // loop_body
      %s22 = ssub.s32 %s17, 1
      %s23 = ssub.s32 %s17, 2
      %s24 = sadd.s32 %s17, 1
      %s25 = ssub.s32 %s17, %s24
      %p26 = scmp.eq.s32.totalorder %s25, 0
      %s28 = sadd.s32 %s27, 1
      %s29 = scalar_select %p26, %s27, %s28
      %p32 = pneg %p26
      %p33 = scmp.eq.s32.totalorder %s17, 1
      %p34 = por %p32, %p33
      %p35 = scmp.ne.s32.totalorder %s27, %s30
      %p36 = scmp.eq.s32.totalorder %s17, 0
      %p37 = por %p35, %p36
      %p38 = scmp.ne.s32.totalorder %s27, %s30
      %p39 = scmp.eq.s32.totalorder %s22, 1
      %p40 = por %p38, %p39
      %p41 = scmp.ne.s32.totalorder %s30, %s31
      %p42 = scmp.eq.s32.totalorder %s22, 0
      %p43 = por %p41, %p42
      %p44 = scmp.ne.s32.totalorder %s30, %s31
      %p45 = scmp.eq.s32.totalorder %s23, 1
      %p46 = por %p44, %p45
      %p48 = scmp.ne.s32.totalorder %s31, %s47
      %p49 = scmp.eq.s32.totalorder %s23, 0
      %p50 = por %p48, %p49
      %s52 = sadd.s32 %s51, 1
      %p55 = scmp.eq.s32.totalorder %s17, 1
      %p56 = scmp.ne.s32.totalorder %s51, %s53
      %p57 = scmp.eq.s32.totalorder %s17, 0
      %p58 = por %p56, %p57
      %p59 = scmp.ne.s32.totalorder %s51, %s53
      %p60 = scmp.eq.s32.totalorder %s22, 1
      %p61 = por %p59, %p60
      %p62 = scmp.ne.s32.totalorder %s53, %s54
      %p63 = scmp.eq.s32.totalorder %s22, 0
      %p64 = por %p62, %p63
      %p65 = scmp.ne.s32.totalorder %s53, %s54
      %p66 = scmp.eq.s32.totalorder %s23, 1
      %p67 = por %p65, %p66
      %p69 = scmp.ne.s32.totalorder %s54, %s68
      %p70 = scmp.eq.s32.totalorder %s23, 0
      %p71 = por %p69, %p70
      %s73 = sadd.s32 %s72, 1
      %p76 = scmp.eq.s32.totalorder %s17, 1
      %p77 = scmp.ne.s32.totalorder %s72, %s74
      %p78 = scmp.eq.s32.totalorder %s17, 0
      %p79 = por %p77, %p78
      %p80 = scmp.ne.s32.totalorder %s72, %s74
      %p81 = scmp.eq.s32.totalorder %s22, 1
      %p82 = por %p80, %p81
      %p83 = scmp.ne.s32.totalorder %s74, %s75
      %p84 = scmp.eq.s32.totalorder %s22, 0
      %p85 = por %p83, %p84
      %p86 = scmp.ne.s32.totalorder %s74, %s75
      %p87 = scmp.eq.s32.totalorder %s23, 1
      %p88 = por %p86, %p87
      %p90 = scmp.ne.s32.totalorder %s75, %s89
      %p91 = scmp.eq.s32.totalorder %s23, 0
      %p92 = por %p90, %p91
      %s94 = sadd.s32 %s93, 1
      %p97 = scmp.eq.s32.totalorder %s17, 1
      %p98 = scmp.ne.s32.totalorder %s93, %s95
      %p99 = scmp.eq.s32.totalorder %s17, 0
      %p100 = por %p98, %p99
      %p101 = scmp.ne.s32.totalorder %s93, %s95
      %p102 = scmp.eq.s32.totalorder %s22, 1
      %p103 = por %p101, %p102
      %p104 = scmp.ne.s32.totalorder %s95, %s96
      %p105 = scmp.eq.s32.totalorder %s22, 0
      %p106 = por %p104, %p105
      %p107 = scmp.ne.s32.totalorder %s95, %s96
      %p108 = scmp.eq.s32.totalorder %s23, 1
      %p109 = por %p107, %p108
      %p111 = scmp.ne.s32.totalorder %s96, %s110
      %p112 = scmp.eq.s32.totalorder %s23, 0
      %p113 = por %p111, %p112
      %s115 = sadd.s32 %s114, 1
      %p118 = scmp.eq.s32.totalorder %s17, 1
      %p119 = scmp.ne.s32.totalorder %s114, %s116
      %p120 = scmp.eq.s32.totalorder %s17, 0
      %p121 = por %p119, %p120
      %p122 = scmp.ne.s32.totalorder %s114, %s116
      %p123 = scmp.eq.s32.totalorder %s22, 1
      %p124 = por %p122, %p123
      %p125 = scmp.ne.s32.totalorder %s116, %s117
      %p126 = scmp.eq.s32.totalorder %s22, 0
      %p127 = por %p125, %p126
      %p128 = scmp.ne.s32.totalorder %s116, %s117
      %p129 = scmp.eq.s32.totalorder %s23, 1
      %p130 = por %p128, %p129
      %p132 = scmp.ne.s32.totalorder %s117, %s131
      %p133 = scmp.eq.s32.totalorder %s23, 0
      %p134 = por %p132, %p133
      %s136 = sadd.s32 %s135, 1
      %p139 = scmp.eq.s32.totalorder %s17, 1
      %p140 = scmp.ne.s32.totalorder %s135, %s137
      %p141 = scmp.eq.s32.totalorder %s17, 0
      %p142 = por %p140, %p141
      %p143 = scmp.ne.s32.totalorder %s135, %s137
      %p144 = scmp.eq.s32.totalorder %s22, 1
      %p145 = por %p143, %p144
      %p146 = scmp.ne.s32.totalorder %s137, %s138
      %p147 = scmp.eq.s32.totalorder %s22, 0
      %p148 = por %p146, %p147
      %p149 = scmp.ne.s32.totalorder %s137, %s138
      %p150 = scmp.eq.s32.totalorder %s23, 1
      %p151 = por %p149, %p150
      %p153 = scmp.ne.s32.totalorder %s138, %s152
      %p154 = scmp.eq.s32.totalorder %s23, 0
      %p155 = por %p153, %p154
      %s156 = ssub.s32 %s17, %s24
      %p157 = scmp.eq.s32.totalorder %s156, 0
      %s159 = sadd.s32 %s158, 1
      %s160 = scalar_select %p157, %s158, %s159
      %p163 = pneg %p157
      %p164 = scmp.eq.s32.totalorder %s17, 1
      %p165 = por %p163, %p164
      %p166 = scmp.ne.s32.totalorder %s158, %s161
      %p167 = scmp.eq.s32.totalorder %s17, 0
      %p168 = por %p166, %p167
      %p169 = scmp.ne.s32.totalorder %s158, %s161
      %p170 = scmp.eq.s32.totalorder %s22, 1
      %p171 = por %p169, %p170
      %p172 = scmp.ne.s32.totalorder %s161, %s162
      %p173 = scmp.eq.s32.totalorder %s22, 0
      %p174 = por %p172, %p173
      %p175 = scmp.ne.s32.totalorder %s161, %s162
      %p176 = scmp.eq.s32.totalorder %s23, 1
      %p177 = por %p175, %p176
      %p179 = scmp.ne.s32.totalorder %s162, %s178
      %p180 = scmp.eq.s32.totalorder %s23, 0
      %p181 = por %p179, %p180
      %p182 = scmp.le.s32.totalorder 1, %s17
      %p183 = scmp.lt.s32.totalorder %s17, 3
      %p184 = pnand %p182, %p183
      %p185 = pneg %p184
      // Predicated region
      $region9: #{tpu_custom_call.1} parent=5 // pred_check
        _
      $region10: #{tpu_custom_call.1} parent=5 // pred_check_branch
        %187 = sbr.rel (%p184) target = $region12
      $region11: #{tpu_custom_call.1} parent=5 // pred_region
        %s188 = ssub.s32 %s17, 1
        // Predicated region
        $region13: #{tpu_custom_call.1} parent=11 // pred_check
          %p189 = pneg %p64
        $region14: #{tpu_custom_call.1} parent=11 // pred_check_branch
          %191 = sbr.rel (%p189) target = $region16
        $region15: #{tpu_custom_call.1} parent=11 // pred_region
          %s193 = ssub.s32 128, 128
          %194 = vsyncadd [#allocation8], %s193
          %s196 = sshll.u32 [#allocation7], 4
          %s197 = int_to_ptr.vmem [resolvable:$true] %s196
          %199 = dma.hbm_to_vmem [thread:$0]  %s1, 128, %s197, [#allocation8]
        $region16: #{tpu_custom_call.1} parent=11 // pred_fallthru
          _
        // Predicated region
        $region17: #{tpu_custom_call.1} parent=11 // pred_check
          %p200 = pneg %p85
        $region18: #{tpu_custom_call.1} parent=11 // pred_check_branch
          %202 = sbr.rel (%p200) target = $region20
        $region19: #{tpu_custom_call.1} parent=11 // pred_region
          %s204 = ssub.s32 128, 128
          %205 = vsyncadd [#allocation11], %s204
          %s207 = sshll.u32 [#allocation10], 4
          %s208 = int_to_ptr.vmem [resolvable:$true] %s207
          %210 = dma.hbm_to_vmem [thread:$0]  %s2, 128, %s208, [#allocation11]
        $region20: #{tpu_custom_call.1} parent=11 // pred_fallthru
          _
        // Predicated region
        $region21: #{tpu_custom_call.1} parent=11 // pred_check
          %p211 = pneg %p106
        $region22: #{tpu_custom_call.1} parent=11 // pred_check_branch
          %213 = sbr.rel (%p211) target = $region24
        $region23: #{tpu_custom_call.1} parent=11 // pred_region
          _
        $region24: #{tpu_custom_call.1} parent=11 // pred_fallthru
          _
        // Predicated region
        $region25: #{tpu_custom_call.1} parent=11 // pred_check
          %p214 = pneg %p127
        $region26: #{tpu_custom_call.1} parent=11 // pred_check_branch
          %216 = sbr.rel (%p214) target = $region28
        $region27: #{tpu_custom_call.1} parent=11 // pred_region
          _
        $region28: #{tpu_custom_call.1} parent=11 // pred_fallthru
          _
        // Predicated region
        $region29: #{tpu_custom_call.1} parent=11 // pred_check
          %p217 = pneg %p148
        $region30: #{tpu_custom_call.1} parent=11 // pred_check_branch
          %219 = sbr.rel (%p217) target = $region32
        $region31: #{tpu_custom_call.1} parent=11 // pred_region
          _
        $region32: #{tpu_custom_call.1} parent=11 // pred_fallthru
          _
      $region12: #{tpu_custom_call.1} parent=5 // pred_fallthru
        _
      %p220 = scmp.lt.s32.totalorder %s17, 2
      // Predicated region
      $region33: #{tpu_custom_call.1} parent=5 // pred_check
        %p221 = pneg %p220
      $region34: #{tpu_custom_call.1} parent=5 // pred_check_branch
        %223 = sbr.rel (%p221) target = $region36
      $region35: #{tpu_custom_call.1} parent=5 // pred_region
        // Predicated region
        $region37: #{tpu_custom_call.1} parent=35 // pred_check
          %p224 = pneg %p37
        $region38: #{tpu_custom_call.1} parent=35 // pred_check_branch
          %226 = sbr.rel (%p224) target = $region40
        $region39: #{tpu_custom_call.1} parent=35 // pred_region
          %p227 = scmp.lt.s32.totalorder %s17, 1
          %s228 = scalar_select %p227, %s17, 1
          %s229 = smul.addr %s228, 2
          %s230 = smul.addr %s229, 4
          %s231 = scalar_lea.vmem %s0, %s230
        $region40: #{tpu_custom_call.1} parent=35 // pred_fallthru
          _
      $region36: #{tpu_custom_call.1} parent=5 // pred_fallthru
        _
      %p232 = scmp.le.s32.totalorder 1, %s17
      %p233 = scmp.lt.s32.totalorder %s17, 3
      %p234 = pnand %p232, %p233
      %p235 = pneg %p234
      // Predicated region
      $region41: #{tpu_custom_call.1} parent=5 // pred_check
        _
      $region42: #{tpu_custom_call.1} parent=5 // pred_check_branch
        %237 = sbr.rel (%p234) target = $region44
      $region43: #{tpu_custom_call.1} parent=5 // pred_region
        %s238 = ssub.s32 %s17, 1
        // Predicated region
        $region45: #{tpu_custom_call.1} parent=43 // pred_check
          %p239 = pneg %p64
        $region46: #{tpu_custom_call.1} parent=43 // pred_check_branch
          %241 = sbr.rel (%p239) target = $region48
        $region47: #{tpu_custom_call.1} parent=43 // pred_region
          %242 = dma.done [#allocation8], 128
        $region48: #{tpu_custom_call.1} parent=43 // pred_fallthru
          _
        // Predicated region
        $region49: #{tpu_custom_call.1} parent=43 // pred_check
          %p243 = pneg %p85
        $region50: #{tpu_custom_call.1} parent=43 // pred_check_branch
          %245 = sbr.rel (%p243) target = $region52
        $region51: #{tpu_custom_call.1} parent=43 // pred_region
          %246 = dma.done [#allocation11], 128
        $region52: #{tpu_custom_call.1} parent=43 // pred_fallthru
          _
        %p247 = scmp.lt.s32.totalorder %s22, 1
        %s248 = scalar_select %p247, %s22, 1
        %s249 = smul.addr %s248, 2
        %s250 = smul.addr %s249, 4
        %s251 = scalar_lea.vmem %s0, %s250
        %p252 = pneg %p43
        %p253 = pneg %p40
        %p254 = pneg %p64
        %p255 = pneg %p61
        %p256 = pneg %p85
        %p257 = pneg %p82
        %p258 = pneg %p106
        %p259 = pneg %p103
        %p260 = pneg %p127
        %p261 = pneg %p124
        %p262 = pneg %p148
        %p263 = pneg %p145
        %p264 = pneg %p174
        %p265 = pneg %p171
        %s266 = sand.u32 %s161, 1
        %s267 = scalar_lea.sflag [#allocation9], %s266
        %s268 = sand.u32 %s161, 1
        %s269 = smul.addr %s268, 24
        %s270 = scalar_lea.vmem [#allocation12], %s269
        %p271 = scmp.lt.s32.totalorder %s22, 1
        %s272 = scalar_select %p271, %s22, 1
        %s273 = smul.addr %s272, 2
        %s274 = smul.addr %s273, 4
        %s275 = scalar_lea.vmem %s0, %s274
        %276 = vst [vmem:[#allocation2] sm:$0xff] 0.0
        %277 = vst [vmem:[#allocation2 + $0x8] sm:$0xff] 0.0
        %vm278 = vcmask 867328
        %279 = vst.msk [vmem:[#allocation2 + $0x10] sm:$0xff] %vm278, 0.0
        %280 = vst [vmem:[#allocation3] sm:$0xff] 0.0
        %281 = vst [vmem:[#allocation3 + $0x8] sm:$0xff] 0.0
        %282 = vst.msk [vmem:[#allocation3 + $0x10] sm:$0xff] %vm278, 0.0
        %283 = vst [vmem:[#allocation4] sm:$0xff] 0.0
        %284 = vst [vmem:[#allocation4 + $0x8] sm:$0xff] 0.0
        %285 = vst.msk [vmem:[#allocation4 + $0x10] sm:$0xff] %vm278, 0.0
        %v286 = vld [vmem:[%s275] sm:$0xff]
        %v287 = vld [vmem:[%s3] sm:$0xf]
        %289 = vset.pattern.permute.xlu0 0
        %290 = vperm.xlu0 %289, %v287
        %v291 = vpop.permute.xlu0 %290
        %v293 = vunpack.c.l.s4 839922192
        %v294 = vunpack.c.0.s8 %v293
        %v295 = vlaneseq
        %v296 = vshrl.u32 %v295, 7
        %v297 = vsub.s32 %v294, %v296
        %v298 = vrot.slane %v291, %v297
        %v300 = vmul.f32 %v286, %v298
        %301 = vset.pattern.permute.xlu0 1
        %302 = vperm.xlu0 %301, %v287
        %v303 = vpop.permute.xlu0 %302
        %v305 = vunpack.c.l.s4 839922192
        %v306 = vunpack.c.0.s8 %v305
        %v307 = vlaneseq
        %v308 = vshrl.u32 %v307, 7
        %v309 = vsub.s32 %v306, %v308
        %v310 = vrot.slane %v303, %v309
        %v312 = vadd.f32 %v300, %v310
        %v313 = vmax.f32 %v312, 0.0
        %315 = vrot.lane.b32.xlu0 %v286, 38
        %v316 = vpop.permute.xlu0 %315
        %vm318 = vcmask 437552
        %319 = vst.msk [vmem:[#allocation2] sm:$0xf] %vm318, %v316
        %321 = vrot.lane.b32.xlu0 %v313, 38
        %v322 = vpop.permute.xlu0 %321
        %324 = vst.msk [vmem:[#allocation3] sm:$0xf] %vm318, %v322
        %325 = vrot.lane.b32.xlu0 %v286, 40
        %v326 = vpop.permute.xlu0 %325
        %vm328 = vcmask 585152
        %329 = vst.msk [vmem:[#allocation2] sm:$0xf] %vm328, %v326
        %330 = vrot.lane.b32.xlu0 %v313, 40
        %v331 = vpop.permute.xlu0 %330
        %333 = vst.msk [vmem:[#allocation3] sm:$0xf] %vm328, %v331
        %334 = vrot.lane.b32.xlu0 %v286, 42
        %v335 = vpop.permute.xlu0 %334
        %vm337 = vcmask 732752
        %338 = vst.msk [vmem:[#allocation2] sm:$0xf] %vm337, %v335
        %339 = vrot.lane.b32.xlu0 %v313, 42
        %v340 = vpop.permute.xlu0 %339
        %342 = vst.msk [vmem:[#allocation3] sm:$0xf] %vm337, %v340
        %343 = vrot.lane.b32.xlu0 %v286, 44
        %v344 = vpop.permute.xlu0 %343
        %vm346 = vcmask 880352
        %347 = vst.msk [vmem:[#allocation2] sm:$0xf] %vm346, %v344
        %348 = vrot.lane.b32.xlu0 %v313, 44
        %v349 = vpop.permute.xlu0 %348
        %351 = vst.msk [vmem:[#allocation3] sm:$0xf] %vm346, %v349
        %352 = vrot.lane.b32.xlu0 %v286, 46
        %v353 = vpop.permute.xlu0 %352
        %vm355 = vcmask 1027952
        %356 = vst.msk [vmem:[#allocation2] sm:$0xf] %vm355, %v353
        %357 = vrot.lane.b32.xlu0 %v313, 46
        %v358 = vpop.permute.xlu0 %357
        %360 = vst.msk [vmem:[#allocation3] sm:$0xf] %vm355, %v358
        %361 = vrot.lane.b32.xlu0 %v286, 48
        %v362 = vpop.permute.xlu0 %361
        %vm364 = vcmask 125952
        %365 = vst.msk [vmem:[#allocation2 + $0x8] sm:$0xf] %vm364, %v362
        %366 = vrot.lane.b32.xlu0 %v313, 48
        %v367 = vpop.permute.xlu0 %366
        %369 = vst.msk [vmem:[#allocation3 + $0x8] sm:$0xf] %vm364, %v367
        %370 = vrot.lane.b32.xlu0 %v286, 50
        %v371 = vpop.permute.xlu0 %370
        %vm373 = vcmask 273552
        %374 = vst.msk [vmem:[#allocation2 + $0x8] sm:$0xf] %vm373, %v371
        %375 = vrot.lane.b32.xlu0 %v313, 50
        %v376 = vpop.permute.xlu0 %375
        %378 = vst.msk [vmem:[#allocation3 + $0x8] sm:$0xf] %vm373, %v376
        %379 = vrot.lane.b32.xlu0 %v286, 52
        %v380 = vpop.permute.xlu0 %379
        %vm382 = vcmask 421152
        %383 = vst.msk [vmem:[#allocation2 + $0x8] sm:$0xf] %vm382, %v380
        %384 = vrot.lane.b32.xlu0 %v313, 52
        %v385 = vpop.permute.xlu0 %384
        %387 = vst.msk [vmem:[#allocation3 + $0x8] sm:$0xf] %vm382, %v385
        %v388 = vcombine.high %v286, %v286
        %389 = vrot.lane.b32.xlu0 %v388, 54
        %v390 = vpop.permute.xlu0 %389
        %vm392 = vcmask 568752
        %393 = vst.msk [vmem:[#allocation2 + $0x8] sm:$0xf] %vm392, %v390
        %v394 = vcombine.high %v313, %v313
        %395 = vrot.lane.b32.xlu0 %v394, 54
        %v396 = vpop.permute.xlu0 %395
        %398 = vst.msk [vmem:[#allocation3 + $0x8] sm:$0xf] %vm392, %v396
        %399 = vrot.lane.b32.xlu0 %v388, 56
        %v400 = vpop.permute.xlu0 %399
        %vm402 = vcmask 716352
        %403 = vst.msk [vmem:[#allocation2 + $0x8] sm:$0xf] %vm402, %v400
        %404 = vrot.lane.b32.xlu0 %v394, 56
        %v405 = vpop.permute.xlu0 %404
        %407 = vst.msk [vmem:[#allocation3 + $0x8] sm:$0xf] %vm402, %v405
        %408 = vrot.lane.b32.xlu0 %v388, 58
        %v409 = vpop.permute.xlu0 %408
        %vm411 = vcmask 863952
        %412 = vst.msk [vmem:[#allocation2 + $0x8] sm:$0xf] %vm411, %v409
        %413 = vrot.lane.b32.xlu0 %v394, 58
        %v414 = vpop.permute.xlu0 %413
        %416 = vst.msk [vmem:[#allocation3 + $0x8] sm:$0xf] %vm411, %v414
        %417 = vrot.lane.b32.xlu0 %v388, 60
        %v418 = vpop.permute.xlu0 %417
        %vm420 = vcmask 1011552
        %421 = vst.msk [vmem:[#allocation2 + $0x8] sm:$0xf] %vm420, %v418
        %422 = vrot.lane.b32.xlu0 %v394, 60
        %v423 = vpop.permute.xlu0 %422
        %425 = vst.msk [vmem:[#allocation3 + $0x8] sm:$0xf] %vm420, %v423
        %426 = vrot.lane.b32.xlu0 %v388, 62
        %v427 = vpop.permute.xlu0 %426
        %vm429 = vcmask 1044464
        %430 = vst.msk [vmem:[#allocation2 + $0x8] sm:$0xf] %vm429, %v427
        %vm431 = vcmask 109568
        %432 = vst.msk [vmem:[#allocation2 + $0x10] sm:$0xf] %vm431, %v427
        %433 = vrot.lane.b32.xlu0 %v394, 62
        %v434 = vpop.permute.xlu0 %433
        %436 = vst.msk [vmem:[#allocation3 + $0x8] sm:$0xf] %vm429, %v434
        %437 = vst.msk [vmem:[#allocation3 + $0x10] sm:$0xf] %vm431, %v434
        %438 = vrot.lane.b32.xlu0 %v388, 64
        %v439 = vpop.permute.xlu0 %438
        %vm441 = vcmask 257152
        %442 = vst.msk [vmem:[#allocation2 + $0x10] sm:$0xf] %vm441, %v439
        %443 = vrot.lane.b32.xlu0 %v394, 64
        %v444 = vpop.permute.xlu0 %443
        %446 = vst.msk [vmem:[#allocation3 + $0x10] sm:$0xf] %vm441, %v444
        %447 = vrot.lane.b32.xlu0 %v388, 66
        %v448 = vpop.permute.xlu0 %447
        %vm450 = vcmask 404752
        %451 = vst.msk [vmem:[#allocation2 + $0x10] sm:$0xf] %vm450, %v448
        %452 = vrot.lane.b32.xlu0 %v394, 66
        %v453 = vpop.permute.xlu0 %452
        %455 = vst.msk [vmem:[#allocation3 + $0x10] sm:$0xf] %vm450, %v453
        %456 = vrot.lane.b32.xlu0 %v388, 68
        %v457 = vpop.permute.xlu0 %456
        %vm459 = vcmask 552352
        %460 = vst.msk [vmem:[#allocation2 + $0x10] sm:$0xf] %vm459, %v457
        %461 = vrot.lane.b32.xlu0 %v394, 68
        %v462 = vpop.permute.xlu0 %461
        %464 = vst.msk [vmem:[#allocation3 + $0x10] sm:$0xf] %vm459, %v462
        %v465 = vld [vmem:[#allocation3] sm:$0xff]
        %v466 = vld [vmem:[#allocation3 + $0x8] sm:$0xff]
        %v467 = vld [vmem:[#allocation3 + $0x10] sm:$0xff]
        %468 = vst [vmem:[#allocation5] sm:$0xff] %v465
        %469 = vst [vmem:[#allocation5 + $0x8] sm:$0xff] %v466
        %vm470 = vcmask 556032
        %471 = vst.msk [vmem:[#allocation5 + $0x10] sm:$0xff] %vm470, %v467
        %v472 = vld [vmem:[#allocation3] sm:$0xff]
        %v473 = vld [vmem:[#allocation3 + $0x8] sm:$0xff]
        %v474 = vld [vmem:[#allocation3 + $0x10] sm:$0xff]
        %478 = vrot.lane.b32.xlu0 %v472, 127
        %v479 = vpop.permute.xlu0 %478
        %480 = vrot.lane.b32.xlu0 %v473, 127
        %v481 = vpop.permute.xlu0 %480
        %482 = vrot.lane.b32.xlu0 %v474, 127
        %v483 = vpop.permute.xlu0 %482
        %vm484 = vcmask 1039360
        %v485 = vsel %vm484, %v479, %v481
        %v486 = vsel %vm484, %v481, %v483
        %490 = vst [vmem:[#allocation5 + $0x18] sm:$0xff] %v485
        %491 = vst [vmem:[#allocation5 + $0x20] sm:$0xff] %v486
        %492 = vst.msk [vmem:[#allocation5 + $0x28] sm:$0xff] %vm470, %v483
        %v493 = vld [vmem:[#allocation3] sm:$0xff]
        %v494 = vld [vmem:[#allocation3 + $0x8] sm:$0xff]
        %v495 = vld [vmem:[#allocation3 + $0x10] sm:$0xff]
        %499 = vrot.lane.b32.xlu0 %v493, 126
        %v500 = vpop.permute.xlu0 %499
        %501 = vrot.lane.b32.xlu0 %v494, 126
        %v502 = vpop.permute.xlu0 %501
        %503 = vrot.lane.b32.xlu0 %v495, 126
        %v504 = vpop.permute.xlu0 %503
        %vm505 = vcmask 1031168
        %v506 = vsel %vm505, %v500, %v502
        %v507 = vsel %vm505, %v502, %v504
        %511 = vst [vmem:[#allocation5 + $0x30] sm:$0xff] %v506
        %512 = vst [vmem:[#allocation5 + $0x38] sm:$0xff] %v507
        %513 = vst.msk [vmem:[#allocation5 + $0x40] sm:$0xff] %vm470, %v504
        %v514 = vld [vmem:[#allocation3] sm:$0xff]
        %v515 = vld [vmem:[#allocation3 + $0x8] sm:$0xff]
        %v516 = vld [vmem:[#allocation3 + $0x10] sm:$0xff]
        %520 = vrot.lane.b32.xlu0 %v514, 110
        %v521 = vpop.permute.xlu0 %520
        %522 = vrot.lane.b32.xlu0 %v515, 110
        %v523 = vpop.permute.xlu0 %522
        %524 = vrot.lane.b32.xlu0 %v516, 110
        %v525 = vpop.permute.xlu0 %524
        %vm526 = vcmask 900096
        %v527 = vsel %vm526, %v521, %v523
        %v528 = vsel %vm526, %v523, %v525
        %532 = vst [vmem:[#allocation5 + $0x48] sm:$0xff] %v527
        %533 = vst [vmem:[#allocation5 + $0x50] sm:$0xff] %v528
        %534 = vst.msk [vmem:[#allocation5 + $0x58] sm:$0xff] %vm470, %v525
        %v535 = vld [vmem:[#allocation3] sm:$0xff]
        %v536 = vld [vmem:[#allocation3 + $0x8] sm:$0xff]
        %v537 = vld [vmem:[#allocation3 + $0x10] sm:$0xff]
        %541 = vrot.lane.b32.xlu0 %v535, 109
        %v542 = vpop.permute.xlu0 %541
        %543 = vrot.lane.b32.xlu0 %v536, 109
        %v544 = vpop.permute.xlu0 %543
        %545 = vrot.lane.b32.xlu0 %v537, 109
        %v546 = vpop.permute.xlu0 %545
        %vm547 = vcmask 891904
        %v548 = vsel %vm547, %v542, %v544
        %v549 = vsel %vm547, %v544, %v546
        %553 = vst [vmem:[#allocation5 + $0x60] sm:$0xff] %v548
        %554 = vst [vmem:[#allocation5 + $0x68] sm:$0xff] %v549
        %555 = vst.msk [vmem:[#allocation5 + $0x70] sm:$0xff] %vm470, %v546
        %v556 = vld [vmem:[#allocation3] sm:$0xff]
        %v557 = vld [vmem:[#allocation3 + $0x8] sm:$0xff]
        %v558 = vld [vmem:[#allocation3 + $0x10] sm:$0xff]
        %562 = vrot.lane.b32.xlu0 %v556, 108
        %v563 = vpop.permute.xlu0 %562
        %564 = vrot.lane.b32.xlu0 %v557, 108
        %v565 = vpop.permute.xlu0 %564
        %566 = vrot.lane.b32.xlu0 %v558, 108
        %v567 = vpop.permute.xlu0 %566
        %vm568 = vcmask 883712
        %v569 = vsel %vm568, %v563, %v565
        %v570 = vsel %vm568, %v565, %v567
        %574 = vst [vmem:[#allocation5 + $0x78] sm:$0xff] %v569
        %575 = vst [vmem:[#allocation5 + $0x80] sm:$0xff] %v570
        %576 = vst.msk [vmem:[#allocation5 + $0x88] sm:$0xff] %vm470, %v567
        %v577 = vld [vmem:[#allocation3] sm:$0xff]
        %v578 = vld [vmem:[#allocation3 + $0x8] sm:$0xff]
        %v579 = vld [vmem:[#allocation3 + $0x10] sm:$0xff]
        %583 = vrot.lane.b32.xlu0 %v577, 92
        %v584 = vpop.permute.xlu0 %583
        %585 = vrot.lane.b32.xlu0 %v578, 92
        %v586 = vpop.permute.xlu0 %585
        %587 = vrot.lane.b32.xlu0 %v579, 92
        %v588 = vpop.permute.xlu0 %587
        %vm589 = vcmask 752640
        %v590 = vsel %vm589, %v584, %v586
        %v591 = vsel %vm589, %v586, %v588
        %595 = vst [vmem:[#allocation5 + $0x90] sm:$0xff] %v590
        %596 = vst [vmem:[#allocation5 + $0x98] sm:$0xff] %v591
        %597 = vst.msk [vmem:[#allocation5 + $0xa0] sm:$0xff] %vm470, %v588
        %v598 = vld [vmem:[#allocation3] sm:$0xff]
        %v599 = vld [vmem:[#allocation3 + $0x8] sm:$0xff]
        %v600 = vld [vmem:[#allocation3 + $0x10] sm:$0xff]
        %604 = vrot.lane.b32.xlu0 %v598, 91
        %v605 = vpop.permute.xlu0 %604
        %606 = vrot.lane.b32.xlu0 %v599, 91
        %v607 = vpop.permute.xlu0 %606
        %608 = vrot.lane.b32.xlu0 %v600, 91
        %v609 = vpop.permute.xlu0 %608
        %vm610 = vcmask 744448
        %v611 = vsel %vm610, %v605, %v607
        %v612 = vsel %vm610, %v607, %v609
        %616 = vst [vmem:[#allocation5 + $0xa8] sm:$0xff] %v611
        %617 = vst [vmem:[#allocation5 + $0xb0] sm:$0xff] %v612
        %618 = vst.msk [vmem:[#allocation5 + $0xb8] sm:$0xff] %vm470, %v609
        %v619 = vld [vmem:[#allocation3] sm:$0xff]
        %v620 = vld [vmem:[#allocation3 + $0x8] sm:$0xff]
        %v621 = vld [vmem:[#allocation3 + $0x10] sm:$0xff]
        %625 = vrot.lane.b32.xlu0 %v619, 90
        %v626 = vpop.permute.xlu0 %625
        %627 = vrot.lane.b32.xlu0 %v620, 90
        %v628 = vpop.permute.xlu0 %627
        %629 = vrot.lane.b32.xlu0 %v621, 90
        %v630 = vpop.permute.xlu0 %629
        %vm631 = vcmask 736256
        %v632 = vsel %vm631, %v626, %v628
        %v633 = vsel %vm631, %v628, %v630
        %637 = vst [vmem:[#allocation5 + $0xc0] sm:$0xff] %v632
        %638 = vst [vmem:[#allocation5 + $0xc8] sm:$0xff] %v633
        %639 = vst.msk [vmem:[#allocation5 + $0xd0] sm:$0xff] %vm470, %v630
        %v640 = vld [vmem:[#allocation7] sm:$0xff]
        %v641 = vld [vmem:[#allocation5] sm:$0xff]
        %v642 = vld [vmem:[#allocation5 + $0x8] sm:$0xff]
        %v643 = vld [vmem:[#allocation5 + $0x10] sm:$0xff]
        %v644 = vld [vmem:[#allocation5 + $0x18] sm:$0xff]
        %v645 = vld [vmem:[#allocation5 + $0x20] sm:$0xff]
        %v646 = vld [vmem:[#allocation5 + $0x28] sm:$0xff]
        %v647 = vld [vmem:[#allocation5 + $0x30] sm:$0xff]
        %v648 = vld [vmem:[#allocation5 + $0x38] sm:$0xff]
        %v649 = vld [vmem:[#allocation5 + $0x40] sm:$0xff]
        %v650 = vld [vmem:[#allocation5 + $0x48] sm:$0xff]
        %v651 = vld [vmem:[#allocation5 + $0x50] sm:$0xff]
        %v652 = vld [vmem:[#allocation5 + $0x58] sm:$0xff]
        %v653 = vld [vmem:[#allocation5 + $0x60] sm:$0xff]
        %v654 = vld [vmem:[#allocation5 + $0x68] sm:$0xff]
        %v655 = vld [vmem:[#allocation5 + $0x70] sm:$0xff]
        %v656 = vld [vmem:[#allocation5 + $0x78] sm:$0xff]
        %v657 = vld [vmem:[#allocation5 + $0x80] sm:$0xff]
        %v658 = vld [vmem:[#allocation5 + $0x88] sm:$0xff]
        %v659 = vld [vmem:[#allocation5 + $0x90] sm:$0xff]
        %v660 = vld [vmem:[#allocation5 + $0x98] sm:$0xff]
        %v661 = vld [vmem:[#allocation5 + $0xa0] sm:$0xff]
        %v662 = vld [vmem:[#allocation5 + $0xa8] sm:$0xff]
        %v663 = vld [vmem:[#allocation5 + $0xb0] sm:$0xff]
        %v664 = vld [vmem:[#allocation5 + $0xb8] sm:$0xff]
        %v665 = vld [vmem:[#allocation5 + $0xc0] sm:$0xff]
        %v666 = vld [vmem:[#allocation5 + $0xc8] sm:$0xff]
        %v667 = vld [vmem:[#allocation5 + $0xd0] sm:$0xff]
        %vm668 = vcmask 588800
        %v670 = vsel %vm668, %v640, 0
        %672 = vmatprep.subr.mxu0 0.0
        %673 = vmatpush1.msra.mxu0 0.0
        %674 = vmatprep.subr.mxu0 0.0
        %675 = vmatpush1.msra.mxu0 0.0
        %676 = vmatprep.subr.mxu0 0.0
        %677 = vmatpush1.msra.mxu0 0.0
        %678 = vmatprep.subr.mxu0 0.0
        %679 = vmatpush1.msra.mxu0 0.0
        %680 = vmatprep.subr.mxu0 0.0
        %681 = vmatpush1.msra.mxu0 0.0
        %682 = vmatprep.subr.mxu0 0.0
        %683 = vmatpush1.msra.mxu0 0.0
        %684 = vmatprep.subr.mxu0 0.0
        %685 = vmatpush1.msra.mxu0 0.0
        %686 = vmatprep.subr.mxu0 %v666
        %687 = vmatpush1.msra.mxu0 %v665
        %688 = vmatprep.subr.mxu0 %v663
        %689 = vmatpush1.msra.mxu0 %v662
        %690 = vmatprep.subr.mxu0 %v660
        %691 = vmatpush1.msra.mxu0 %v659
        %692 = vmatprep.subr.mxu0 %v657
        %693 = vmatpush1.msra.mxu0 %v656
        %694 = vmatprep.subr.mxu0 %v654
        %695 = vmatpush1.msra.mxu0 %v653
        %696 = vmatprep.subr.mxu0 %v651
        %697 = vmatpush1.msra.mxu0 %v650
        %698 = vmatprep.subr.mxu0 %v648
        %699 = vmatpush1.msra.mxu0 %v647
        %700 = vmatprep.subr.mxu0 %v645
        %701 = vmatpush1.msra.mxu0 %v644
        %702 = vmatprep.subr.mxu0 %v642
        %703 = vmatpush1.msra.mxu0 %v641
        %704 = vmatprep.subr.mxu0 0.0
        %705 = vmatpush2.msra.mxu0 0.0
        %706 = vmatprep.subr.mxu0 0.0
        %707 = vmatpush2.msra.mxu0 0.0
        %708 = vmatprep.subr.mxu0 0.0
        %709 = vmatpush2.msra.mxu0 0.0
        %710 = vmatprep.subr.mxu0 0.0
        %711 = vmatpush2.msra.mxu0 0.0
        %712 = vmatprep.subr.mxu0 0.0
        %713 = vmatpush2.msra.mxu0 0.0
        %714 = vmatprep.subr.mxu0 0.0
        %715 = vmatpush2.msra.mxu0 0.0
        %716 = vmatprep.subr.mxu0 0.0
        %717 = vmatpush2.msra.mxu0 0.0
        %718 = vmatprep.subr.mxu0 0.0
        %719 = vmatpush2.msra.mxu0 0.0
        %720 = vmatprep.subr.mxu0 0.0
        %721 = vmatpush2.msra.mxu0 0.0
        %722 = vmatprep.subr.mxu0 0.0
        %723 = vmatpush2.msra.mxu0 0.0
        %724 = vmatprep.subr.mxu0 0.0
        %725 = vmatpush2.msra.mxu0 0.0
        %726 = vmatprep.subr.mxu0 0.0
        %727 = vmatpush2.msra.mxu0 0.0
        %728 = vmatprep.subr.mxu0 0.0
        %729 = vmatpush2.msra.mxu0 0.0
        %730 = vmatprep.subr.mxu0 0.0
        %731 = vmatpush2.msra.mxu0 0.0
        %732 = vmatprep.subr.mxu0 0.0
        %733 = vmatpush2.msra.mxu0 0.0
        %734 = vmatprep.subr.mxu0 0.0
        %735 = vmatpush2.msra.mxu0 0.0
        %736 = vmatprep.mubr.f32.mxu0 0.0
        %737 = vmatmul.mubr.f32.gmra.mxu0 %v670
        %v738 = vpop.f32.mrf.mxu0
        %v739 = vadd.f32 0.0, %v738
        %v740 = vpop.f32.mrf.mxu0
        %v741 = vadd.f32 0.0, %v740
        %742 = vdwg.mxu0
        %743 = vmatprep.subr.mxu0 0.0
        %744 = vmatpush1.msra.mxu0 0.0
        %745 = vmatprep.subr.mxu0 0.0
        %746 = vmatpush1.msra.mxu0 0.0
        %747 = vmatprep.subr.mxu0 0.0
        %748 = vmatpush1.msra.mxu0 0.0
        %749 = vmatprep.subr.mxu0 0.0
        %750 = vmatpush1.msra.mxu0 0.0
        %751 = vmatprep.subr.mxu0 0.0
        %752 = vmatpush1.msra.mxu0 0.0
        %753 = vmatprep.subr.mxu0 0.0
        %754 = vmatpush1.msra.mxu0 0.0
        %755 = vmatprep.subr.mxu0 0.0
        %756 = vmatpush1.msra.mxu0 0.0
        %757 = vmatprep.subr.mxu0 0.0
        %758 = vmatpush1.msra.mxu0 %v667
        %759 = vmatprep.subr.mxu0 0.0
        %760 = vmatpush1.msra.mxu0 %v664
        %761 = vmatprep.subr.mxu0 0.0
        %762 = vmatpush1.msra.mxu0 %v661
        %763 = vmatprep.subr.mxu0 0.0
        %764 = vmatpush1.msra.mxu0 %v658
        %765 = vmatprep.subr.mxu0 0.0
        %766 = vmatpush1.msra.mxu0 %v655
        %767 = vmatprep.subr.mxu0 0.0
        %768 = vmatpush1.msra.mxu0 %v652
        %769 = vmatprep.subr.mxu0 0.0
        %770 = vmatpush1.msra.mxu0 %v649
        %771 = vmatprep.subr.mxu0 0.0
        %772 = vmatpush1.msra.mxu0 %v646
        %773 = vmatprep.subr.mxu0 0.0
        %774 = vmatpush1.msra.mxu0 %v643
        %775 = vmatprep.subr.mxu0 0.0
        %776 = vmatpush2.msra.mxu0 0.0
        %777 = vmatprep.subr.mxu0 0.0
        %778 = vmatpush2.msra.mxu0 0.0
        %779 = vmatprep.subr.mxu0 0.0
        %780 = vmatpush2.msra.mxu0 0.0
        %781 = vmatprep.subr.mxu0 0.0
        %782 = vmatpush2.msra.mxu0 0.0
        %783 = vmatprep.subr.mxu0 0.0
        %784 = vmatpush2.msra.mxu0 0.0
        %785 = vmatprep.subr.mxu0 0.0
        %786 = vmatpush2.msra.mxu0 0.0
        %787 = vmatprep.subr.mxu0 0.0
        %788 = vmatpush2.msra.mxu0 0.0
        %789 = vmatprep.subr.mxu0 0.0
        %790 = vmatpush2.msra.mxu0 0.0
        %791 = vmatprep.subr.mxu0 0.0
        %792 = vmatpush2.msra.mxu0 0.0
        %793 = vmatprep.subr.mxu0 0.0
        %794 = vmatpush2.msra.mxu0 0.0
        %795 = vmatprep.subr.mxu0 0.0
        %796 = vmatpush2.msra.mxu0 0.0
        %797 = vmatprep.subr.mxu0 0.0
        %798 = vmatpush2.msra.mxu0 0.0
        %799 = vmatprep.subr.mxu0 0.0
        %800 = vmatpush2.msra.mxu0 0.0
        %801 = vmatprep.subr.mxu0 0.0
        %802 = vmatpush2.msra.mxu0 0.0
        %803 = vmatprep.subr.mxu0 0.0
        %804 = vmatpush2.msra.mxu0 0.0
        %805 = vmatprep.subr.mxu0 0.0
        %806 = vmatpush2.msra.mxu0 0.0
        %807 = vmatprep.mubr.f32.mxu0 0.0
        %808 = vmatmul.mubr.f32.gmra.mxu0 %v670
        %v809 = vpop.f32.mrf.mxu0
        %v810 = vadd.f32 0.0, %v809
        %v811 = vpop.f32.mrf.mxu0
        %812 = vdwg.mxu0
        %v813 = vld [vmem:[%s4] sm:$0xff]
        %815 = vset.pattern.permute.xlu0 0
        %816 = vperm.xlu0 %815, %v813
        %v817 = vpop.permute.xlu0 %816
        %v819 = vmul.f32 %v739, %v817
        %v820 = vmul.f32 %v741, %v817
        %v821 = vmul.f32 %v810, %v817
        %822 = vset.pattern.permute.xlu0 1
        %823 = vperm.xlu0 %822, %v813
        %v824 = vpop.permute.xlu0 %823
        %v826 = vadd.f32 %v819, %v824
        %v827 = vadd.f32 %v820, %v824
        %v828 = vadd.f32 %v821, %v824
        %v829 = vmax.f32 %v826, 0.0
        %v830 = vmax.f32 %v827, 0.0
        %v831 = vmax.f32 %v828, 0.0
        %v832 = vld [vmem:[%s5] sm:$0x7]
        %v834 = vlaneseq
        %v835 = vshrl.u32 %v834, 7
        %v836 = vsub.s32 0, %v835
        %v837 = vrot.slane %v832, %v836
        %v838 = vlaneseq
        %v839 = vshrl.u32 %v838, 7
        %v840 = vsub.s32 1, %v839
        %v841 = vrot.slane %v832, %v840
        %v842 = vlaneseq
        %v843 = vshrl.u32 %v842, 7
        %v844 = vsub.s32 2, %v843
        %v845 = vrot.slane %v832, %v844
        %v849 = vmul.f32 %v829, %v837
        %v850 = vmul.f32 %v830, %v841
        %v851 = vmul.f32 %v831, %v845
        %855 = vrot.lane.b32.xlu0 %v849, 19
        %v856 = vpop.permute.xlu0 %855
        %857 = vrot.lane.b32.xlu0 %v850, 19
        %v858 = vpop.permute.xlu0 %857
        %859 = vrot.lane.b32.xlu0 %v851, 19
        %v860 = vpop.permute.xlu0 %859
        %vm861 = vcmask 154624
        %v862 = vsel %vm861, %v856, %v858
        %v863 = vsel %vm861, %v858, %v860
        %vm867 = vcmask 1047704
        %868 = vst.msk [vmem:[#allocation4] sm:$0xff] %vm867, %v856
        %869 = vst [vmem:[#allocation4 + $0x8] sm:$0xff] %v862
        %vm870 = vcmask 711680
        %871 = vst.msk [vmem:[#allocation4 + $0x10] sm:$0xff] %vm870, %v863
        %v872 = vld [vmem:[#allocation4] sm:$0xff]
        %v873 = vld [vmem:[#allocation4 + $0x8] sm:$0xff]
        %v874 = vld [vmem:[#allocation4 + $0x10] sm:$0xff]
        %875 = vst [vmem:[#allocation6] sm:$0xff] %v872
        %876 = vst [vmem:[#allocation6 + $0x8] sm:$0xff] %v873
        %877 = vst.msk [vmem:[#allocation6 + $0x10] sm:$0xff] %vm470, %v874
        %v878 = vld [vmem:[#allocation4] sm:$0xff]
        %v879 = vld [vmem:[#allocation4 + $0x8] sm:$0xff]
        %v880 = vld [vmem:[#allocation4 + $0x10] sm:$0xff]
        %884 = vrot.lane.b32.xlu0 %v878, 127
        %v885 = vpop.permute.xlu0 %884
        %886 = vrot.lane.b32.xlu0 %v879, 127
        %v887 = vpop.permute.xlu0 %886
        %888 = vrot.lane.b32.xlu0 %v880, 127
        %v889 = vpop.permute.xlu0 %888
        %v890 = vsel %vm484, %v885, %v887
        %v891 = vsel %vm484, %v887, %v889
        %895 = vst [vmem:[#allocation6 + $0x18] sm:$0xff] %v890
        %896 = vst [vmem:[#allocation6 + $0x20] sm:$0xff] %v891
        %897 = vst.msk [vmem:[#allocation6 + $0x28] sm:$0xff] %vm470, %v889
        %v898 = vld [vmem:[#allocation4] sm:$0xff]
        %v899 = vld [vmem:[#allocation4 + $0x8] sm:$0xff]
        %v900 = vld [vmem:[#allocation4 + $0x10] sm:$0xff]
        %904 = vrot.lane.b32.xlu0 %v898, 126
        %v905 = vpop.permute.xlu0 %904
        %906 = vrot.lane.b32.xlu0 %v899, 126
        %v907 = vpop.permute.xlu0 %906
        %908 = vrot.lane.b32.xlu0 %v900, 126
        %v909 = vpop.permute.xlu0 %908
        %v910 = vsel %vm505, %v905, %v907
        %v911 = vsel %vm505, %v907, %v909
        %915 = vst [vmem:[#allocation6 + $0x30] sm:$0xff] %v910
        %916 = vst [vmem:[#allocation6 + $0x38] sm:$0xff] %v911
        %917 = vst.msk [vmem:[#allocation6 + $0x40] sm:$0xff] %vm470, %v909
        %v918 = vld [vmem:[#allocation4] sm:$0xff]
        %v919 = vld [vmem:[#allocation4 + $0x8] sm:$0xff]
        %v920 = vld [vmem:[#allocation4 + $0x10] sm:$0xff]
        %924 = vrot.lane.b32.xlu0 %v918, 110
        %v925 = vpop.permute.xlu0 %924
        %926 = vrot.lane.b32.xlu0 %v919, 110
        %v927 = vpop.permute.xlu0 %926
        %928 = vrot.lane.b32.xlu0 %v920, 110
        %v929 = vpop.permute.xlu0 %928
        %v930 = vsel %vm526, %v925, %v927
        %v931 = vsel %vm526, %v927, %v929
        %935 = vst [vmem:[#allocation6 + $0x48] sm:$0xff] %v930
        %936 = vst [vmem:[#allocation6 + $0x50] sm:$0xff] %v931
        %937 = vst.msk [vmem:[#allocation6 + $0x58] sm:$0xff] %vm470, %v929
        %v938 = vld [vmem:[#allocation4] sm:$0xff]
        %v939 = vld [vmem:[#allocation4 + $0x8] sm:$0xff]
        %v940 = vld [vmem:[#allocation4 + $0x10] sm:$0xff]
        %944 = vrot.lane.b32.xlu0 %v938, 109
        %v945 = vpop.permute.xlu0 %944
        %946 = vrot.lane.b32.xlu0 %v939, 109
        %v947 = vpop.permute.xlu0 %946
        %948 = vrot.lane.b32.xlu0 %v940, 109
        %v949 = vpop.permute.xlu0 %948
        %v950 = vsel %vm547, %v945, %v947
        %v951 = vsel %vm547, %v947, %v949
        %955 = vst [vmem:[#allocation6 + $0x60] sm:$0xff] %v950
        %956 = vst [vmem:[#allocation6 + $0x68] sm:$0xff] %v951
        %957 = vst.msk [vmem:[#allocation6 + $0x70] sm:$0xff] %vm470, %v949
        %v958 = vld [vmem:[#allocation4] sm:$0xff]
        %v959 = vld [vmem:[#allocation4 + $0x8] sm:$0xff]
        %v960 = vld [vmem:[#allocation4 + $0x10] sm:$0xff]
        %964 = vrot.lane.b32.xlu0 %v958, 108
        %v965 = vpop.permute.xlu0 %964
        %966 = vrot.lane.b32.xlu0 %v959, 108
        %v967 = vpop.permute.xlu0 %966
        %968 = vrot.lane.b32.xlu0 %v960, 108
        %v969 = vpop.permute.xlu0 %968
        %v970 = vsel %vm568, %v965, %v967
        %v971 = vsel %vm568, %v967, %v969
        %975 = vst [vmem:[#allocation6 + $0x78] sm:$0xff] %v970
        %976 = vst [vmem:[#allocation6 + $0x80] sm:$0xff] %v971
        %977 = vst.msk [vmem:[#allocation6 + $0x88] sm:$0xff] %vm470, %v969
        %v978 = vld [vmem:[#allocation4] sm:$0xff]
        %v979 = vld [vmem:[#allocation4 + $0x8] sm:$0xff]
        %v980 = vld [vmem:[#allocation4 + $0x10] sm:$0xff]
        %984 = vrot.lane.b32.xlu0 %v978, 92
        %v985 = vpop.permute.xlu0 %984
        %986 = vrot.lane.b32.xlu0 %v979, 92
        %v987 = vpop.permute.xlu0 %986
        %988 = vrot.lane.b32.xlu0 %v980, 92
        %v989 = vpop.permute.xlu0 %988
        %v990 = vsel %vm589, %v985, %v987
        %v991 = vsel %vm589, %v987, %v989
        %995 = vst [vmem:[#allocation6 + $0x90] sm:$0xff] %v990
        %996 = vst [vmem:[#allocation6 + $0x98] sm:$0xff] %v991
        %997 = vst.msk [vmem:[#allocation6 + $0xa0] sm:$0xff] %vm470, %v989
        %v998 = vld [vmem:[#allocation4] sm:$0xff]
        %v999 = vld [vmem:[#allocation4 + $0x8] sm:$0xff]
        %v1000 = vld [vmem:[#allocation4 + $0x10] sm:$0xff]
        %1004 = vrot.lane.b32.xlu0 %v998, 91
        %v1005 = vpop.permute.xlu0 %1004
        %1006 = vrot.lane.b32.xlu0 %v999, 91
        %v1007 = vpop.permute.xlu0 %1006
        %1008 = vrot.lane.b32.xlu0 %v1000, 91
        %v1009 = vpop.permute.xlu0 %1008
        %v1010 = vsel %vm610, %v1005, %v1007
        %v1011 = vsel %vm610, %v1007, %v1009
        %1015 = vst [vmem:[#allocation6 + $0xa8] sm:$0xff] %v1010
        %1016 = vst [vmem:[#allocation6 + $0xb0] sm:$0xff] %v1011
        %1017 = vst.msk [vmem:[#allocation6 + $0xb8] sm:$0xff] %vm470, %v1009
        %v1018 = vld [vmem:[#allocation4] sm:$0xff]
        %v1019 = vld [vmem:[#allocation4 + $0x8] sm:$0xff]
        %v1020 = vld [vmem:[#allocation4 + $0x10] sm:$0xff]
        %1024 = vrot.lane.b32.xlu0 %v1018, 90
        %v1025 = vpop.permute.xlu0 %1024
        %1026 = vrot.lane.b32.xlu0 %v1019, 90
        %v1027 = vpop.permute.xlu0 %1026
        %1028 = vrot.lane.b32.xlu0 %v1020, 90
        %v1029 = vpop.permute.xlu0 %1028
        %v1030 = vsel %vm631, %v1025, %v1027
        %v1031 = vsel %vm631, %v1027, %v1029
        %1035 = vst [vmem:[#allocation6 + $0xc0] sm:$0xff] %v1030
        %1036 = vst [vmem:[#allocation6 + $0xc8] sm:$0xff] %v1031
        %1037 = vst.msk [vmem:[#allocation6 + $0xd0] sm:$0xff] %vm470, %v1029
        %v1038 = vld [vmem:[#allocation2] sm:$0xff]
        %v1039 = vld [vmem:[#allocation2 + $0x8] sm:$0xff]
        %v1040 = vld [vmem:[#allocation2 + $0x10] sm:$0xff]
        %1044 = vrot.lane.b32.xlu0 %v1038, 109
        %v1045 = vpop.permute.xlu0 %1044
        %1046 = vrot.lane.b32.xlu0 %v1039, 109
        %v1047 = vpop.permute.xlu0 %1046
        %1048 = vrot.lane.b32.xlu0 %v1040, 109
        %v1049 = vpop.permute.xlu0 %1048
        %v1050 = vsel %vm547, %v1045, %v1047
        %v1051 = vsel %vm547, %v1047, %v1049
        %1055 = vst [vmem:[#allocation6 + $0xd8] sm:$0xff] %v1050
        %1056 = vst [vmem:[#allocation6 + $0xe0] sm:$0xff] %v1051
        %1057 = vst.msk [vmem:[#allocation6 + $0xe8] sm:$0xff] %vm470, %v1049
        %v1058 = vld [vmem:[#allocation10] sm:$0xff]
        %v1059 = vld [vmem:[#allocation6] sm:$0xff]
        %v1060 = vld [vmem:[#allocation6 + $0x8] sm:$0xff]
        %v1061 = vld [vmem:[#allocation6 + $0x10] sm:$0xff]
        %v1062 = vld [vmem:[#allocation6 + $0x18] sm:$0xff]
        %v1063 = vld [vmem:[#allocation6 + $0x20] sm:$0xff]
        %v1064 = vld [vmem:[#allocation6 + $0x28] sm:$0xff]
        %v1065 = vld [vmem:[#allocation6 + $0x30] sm:$0xff]
        %v1066 = vld [vmem:[#allocation6 + $0x38] sm:$0xff]
        %v1067 = vld [vmem:[#allocation6 + $0x40] sm:$0xff]
        %v1068 = vld [vmem:[#allocation6 + $0x48] sm:$0xff]
        %v1069 = vld [vmem:[#allocation6 + $0x50] sm:$0xff]
        %v1070 = vld [vmem:[#allocation6 + $0x58] sm:$0xff]
        %v1071 = vld [vmem:[#allocation6 + $0x60] sm:$0xff]
        %v1072 = vld [vmem:[#allocation6 + $0x68] sm:$0xff]
        %v1073 = vld [vmem:[#allocation6 + $0x70] sm:$0xff]
        %v1074 = vld [vmem:[#allocation6 + $0x78] sm:$0xff]
        %v1075 = vld [vmem:[#allocation6 + $0x80] sm:$0xff]
        %v1076 = vld [vmem:[#allocation6 + $0x88] sm:$0xff]
        %v1077 = vld [vmem:[#allocation6 + $0x90] sm:$0xff]
        %v1078 = vld [vmem:[#allocation6 + $0x98] sm:$0xff]
        %v1079 = vld [vmem:[#allocation6 + $0xa0] sm:$0xff]
        %v1080 = vld [vmem:[#allocation6 + $0xa8] sm:$0xff]
        %v1081 = vld [vmem:[#allocation6 + $0xb0] sm:$0xff]
        %v1082 = vld [vmem:[#allocation6 + $0xb8] sm:$0xff]
        %v1083 = vld [vmem:[#allocation6 + $0xc0] sm:$0xff]
        %v1084 = vld [vmem:[#allocation6 + $0xc8] sm:$0xff]
        %v1085 = vld [vmem:[#allocation6 + $0xd0] sm:$0xff]
        %v1086 = vld [vmem:[#allocation6 + $0xd8] sm:$0xff]
        %v1087 = vld [vmem:[#allocation6 + $0xe0] sm:$0xff]
        %v1088 = vld [vmem:[#allocation6 + $0xe8] sm:$0xff]
        %vm1089 = vcmask 654336
        %v1091 = vsel %vm1089, %v1058, 0
        %1093 = vmatprep.subr.mxu0 0.0
        %1094 = vmatpush1.msra.mxu0 0.0
        %1095 = vmatprep.subr.mxu0 0.0
        %1096 = vmatpush1.msra.mxu0 0.0
        %1097 = vmatprep.subr.mxu0 0.0
        %1098 = vmatpush1.msra.mxu0 0.0
        %1099 = vmatprep.subr.mxu0 0.0
        %1100 = vmatpush1.msra.mxu0 0.0
        %1101 = vmatprep.subr.mxu0 0.0
        %1102 = vmatpush1.msra.mxu0 0.0
        %1103 = vmatprep.subr.mxu0 0.0
        %1104 = vmatpush1.msra.mxu0 0.0
        %1105 = vmatprep.subr.mxu0 %v1087
        %1106 = vmatpush1.msra.mxu0 %v1086
        %1107 = vmatprep.subr.mxu0 %v1084
        %1108 = vmatpush1.msra.mxu0 %v1083
        %1109 = vmatprep.subr.mxu0 %v1081
        %1110 = vmatpush1.msra.mxu0 %v1080
        %1111 = vmatprep.subr.mxu0 %v1078
        %1112 = vmatpush1.msra.mxu0 %v1077
        %1113 = vmatprep.subr.mxu0 %v1075
        %1114 = vmatpush1.msra.mxu0 %v1074
        %1115 = vmatprep.subr.mxu0 %v1072
        %1116 = vmatpush1.msra.mxu0 %v1071
        %1117 = vmatprep.subr.mxu0 %v1069
        %1118 = vmatpush1.msra.mxu0 %v1068
        %1119 = vmatprep.subr.mxu0 %v1066
        %1120 = vmatpush1.msra.mxu0 %v1065
        %1121 = vmatprep.subr.mxu0 %v1063
        %1122 = vmatpush1.msra.mxu0 %v1062
        %1123 = vmatprep.subr.mxu0 %v1060
        %1124 = vmatpush1.msra.mxu0 %v1059
        %1125 = vmatprep.subr.mxu0 0.0
        %1126 = vmatpush2.msra.mxu0 0.0
        %1127 = vmatprep.subr.mxu0 0.0
        %1128 = vmatpush2.msra.mxu0 0.0
        %1129 = vmatprep.subr.mxu0 0.0
        %1130 = vmatpush2.msra.mxu0 0.0
        %1131 = vmatprep.subr.mxu0 0.0
        %1132 = vmatpush2.msra.mxu0 0.0
        %1133 = vmatprep.subr.mxu0 0.0
        %1134 = vmatpush2.msra.mxu0 0.0
        %1135 = vmatprep.subr.mxu0 0.0
        %1136 = vmatpush2.msra.mxu0 0.0
        %1137 = vmatprep.subr.mxu0 0.0
        %1138 = vmatpush2.msra.mxu0 0.0
        %1139 = vmatprep.subr.mxu0 0.0
        %1140 = vmatpush2.msra.mxu0 0.0
        %1141 = vmatprep.subr.mxu0 0.0
        %1142 = vmatpush2.msra.mxu0 0.0
        %1143 = vmatprep.subr.mxu0 0.0
        %1144 = vmatpush2.msra.mxu0 0.0
        %1145 = vmatprep.subr.mxu0 0.0
        %1146 = vmatpush2.msra.mxu0 0.0
        %1147 = vmatprep.subr.mxu0 0.0
        %1148 = vmatpush2.msra.mxu0 0.0
        %1149 = vmatprep.subr.mxu0 0.0
        %1150 = vmatpush2.msra.mxu0 0.0
        %1151 = vmatprep.subr.mxu0 0.0
        %1152 = vmatpush2.msra.mxu0 0.0
        %1153 = vmatprep.subr.mxu0 0.0
        %1154 = vmatpush2.msra.mxu0 0.0
        %1155 = vmatprep.subr.mxu0 0.0
        %1156 = vmatpush2.msra.mxu0 0.0
        %1157 = vmatprep.mubr.f32.mxu0 0.0
        %1158 = vmatmul.mubr.f32.gmra.mxu0 %v1091
        %v1159 = vpop.f32.mrf.mxu0
        %v1160 = vadd.f32 0.0, %v1159
        %v1161 = vpop.f32.mrf.mxu0
        %v1162 = vadd.f32 0.0, %v1161
        %1163 = vdwg.mxu0
        %1164 = vmatprep.subr.mxu0 0.0
        %1165 = vmatpush1.msra.mxu0 0.0
        %1166 = vmatprep.subr.mxu0 0.0
        %1167 = vmatpush1.msra.mxu0 0.0
        %1168 = vmatprep.subr.mxu0 0.0
        %1169 = vmatpush1.msra.mxu0 0.0
        %1170 = vmatprep.subr.mxu0 0.0
        %1171 = vmatpush1.msra.mxu0 0.0
        %1172 = vmatprep.subr.mxu0 0.0
        %1173 = vmatpush1.msra.mxu0 0.0
        %1174 = vmatprep.subr.mxu0 0.0
        %1175 = vmatpush1.msra.mxu0 0.0
        %1176 = vmatprep.subr.mxu0 0.0
        %1177 = vmatpush1.msra.mxu0 %v1088
        %1178 = vmatprep.subr.mxu0 0.0
        %1179 = vmatpush1.msra.mxu0 %v1085
        %1180 = vmatprep.subr.mxu0 0.0
        %1181 = vmatpush1.msra.mxu0 %v1082
        %1182 = vmatprep.subr.mxu0 0.0
        %1183 = vmatpush1.msra.mxu0 %v1079
        %1184 = vmatprep.subr.mxu0 0.0
        %1185 = vmatpush1.msra.mxu0 %v1076
        %1186 = vmatprep.subr.mxu0 0.0
        %1187 = vmatpush1.msra.mxu0 %v1073
        %1188 = vmatprep.subr.mxu0 0.0
        %1189 = vmatpush1.msra.mxu0 %v1070
        %1190 = vmatprep.subr.mxu0 0.0
        %1191 = vmatpush1.msra.mxu0 %v1067
        %1192 = vmatprep.subr.mxu0 0.0
        %1193 = vmatpush1.msra.mxu0 %v1064
        %1194 = vmatprep.subr.mxu0 0.0
        %1195 = vmatpush1.msra.mxu0 %v1061
        %1196 = vmatprep.subr.mxu0 0.0
        %1197 = vmatpush2.msra.mxu0 0.0
        %1198 = vmatprep.subr.mxu0 0.0
        %1199 = vmatpush2.msra.mxu0 0.0
        %1200 = vmatprep.subr.mxu0 0.0
        %1201 = vmatpush2.msra.mxu0 0.0
        %1202 = vmatprep.subr.mxu0 0.0
        %1203 = vmatpush2.msra.mxu0 0.0
        %1204 = vmatprep.subr.mxu0 0.0
        %1205 = vmatpush2.msra.mxu0 0.0
        %1206 = vmatprep.subr.mxu0 0.0
        %1207 = vmatpush2.msra.mxu0 0.0
        %1208 = vmatprep.subr.mxu0 0.0
        %1209 = vmatpush2.msra.mxu0 0.0
        %1210 = vmatprep.subr.mxu0 0.0
        %1211 = vmatpush2.msra.mxu0 0.0
        %1212 = vmatprep.subr.mxu0 0.0
        %1213 = vmatpush2.msra.mxu0 0.0
        %1214 = vmatprep.subr.mxu0 0.0
        %1215 = vmatpush2.msra.mxu0 0.0
        %1216 = vmatprep.subr.mxu0 0.0
        %1217 = vmatpush2.msra.mxu0 0.0
        %1218 = vmatprep.subr.mxu0 0.0
        %1219 = vmatpush2.msra.mxu0 0.0
        %1220 = vmatprep.subr.mxu0 0.0
        %1221 = vmatpush2.msra.mxu0 0.0
        %1222 = vmatprep.subr.mxu0 0.0
        %1223 = vmatpush2.msra.mxu0 0.0
        %1224 = vmatprep.subr.mxu0 0.0
        %1225 = vmatpush2.msra.mxu0 0.0
        %1226 = vmatprep.subr.mxu0 0.0
        %1227 = vmatpush2.msra.mxu0 0.0
        %1228 = vmatprep.mubr.f32.mxu0 0.0
        %1229 = vmatmul.mubr.f32.gmra.mxu0 %v1091
        %v1230 = vpop.f32.mrf.mxu0
        %v1231 = vadd.f32 0.0, %v1230
        %v1232 = vpop.f32.mrf.mxu0
        %1233 = vdwg.mxu0
        %1234 = vst [vmem:[%s270] sm:$0xff] %v1160
        %1235 = vst [vmem:[%s270 + $0x8] sm:$0xff] %v1162
        %1236 = vst.msk [vmem:[%s270 + $0x10] sm:$0xff] %vm470, %v1231
        %s1237 = sand.u32 %s161, 1
        %s1238 = scalar_lea.sflag [#allocation9], %s1237
        %s1239 = sand.u32 %s161, 1
        %s1240 = smul.addr %s1239, 24
        %s1241 = scalar_lea.vmem [#allocation12], %s1240
        // Predicated region
        $region53: #{tpu_custom_call.1} parent=43 // pred_check
          %p1242 = pneg %p171
        $region54: #{tpu_custom_call.1} parent=43 // pred_check_branch
          %1244 = sbr.rel (%p1242) target = $region56
        $region55: #{tpu_custom_call.1} parent=43 // pred_region
          %s1246 = ssub.s32 384, 384
          %1247 = vsyncadd %s1238, %s1246
          %s1248 = smul.addr %s22, 3
          %s1249 = smul.addr %s1248, 128
          %s1250 = scalar_lea.hbm %s6, %s1249
          %s1252 = sshll.u32 %s1241, 4
          %s1253 = int_to_ptr.vmem [resolvable:$true] %s1252
          %1255 = dma.vmem_to_hbm [thread:$0]  %s1253, 384, %s1250, %s1238
        $region56: #{tpu_custom_call.1} parent=43 // pred_fallthru
          _
      $region44: #{tpu_custom_call.1} parent=5 // pred_fallthru
        _
      %p1256 = scmp.le.s32.totalorder 2, %s17
      // Predicated region
      $region57: #{tpu_custom_call.1} parent=5 // pred_check
        %p1257 = pneg %p1256
      $region58: #{tpu_custom_call.1} parent=5 // pred_check_branch
        %1259 = sbr.rel (%p1257) target = $region60
      $region59: #{tpu_custom_call.1} parent=5 // pred_region
        %s1260 = ssub.s32 %s17, 2
        // Predicated region
        $region61: #{tpu_custom_call.1} parent=59 // pred_check
          %p1261 = pneg %p177
        $region62: #{tpu_custom_call.1} parent=59 // pred_check_branch
          %1263 = sbr.rel (%p1261) target = $region64
        $region63: #{tpu_custom_call.1} parent=59 // pred_region
          %s1264 = sand.u32 %s162, 1
          %s1265 = scalar_lea.sflag [#allocation9], %s1264
          %s1266 = sand.u32 %s162, 1
          %s1267 = smul.addr %s1266, 24
          %s1268 = scalar_lea.vmem [#allocation12], %s1267
          %1269 = dma.done %s1265, 384
        $region64: #{tpu_custom_call.1} parent=59 // pred_fallthru
          _
      $region60: #{tpu_custom_call.1} parent=5 // pred_fallthru
        _
    $region6: #{tpu_custom_call.1} parent=1 // loop_footer
      %s21 = sadd.s32 1, %s17
    $region7: #{tpu_custom_call.1} parent=1 // loop_footer_branch
      %16 = sbr.rel target = $region3
    $region8: #{tpu_custom_call.1} parent=1 // loop_exit
      _
    %1270 = vsyncpa [#allocation8], 1
    %s1271 = scalar_lea.sflag [#allocation8], 1
    %1272 = vsyncpa %s1271, 1
    %1273 = vsyncpa [#allocation11], 1
    %1274 = vsyncpa [#allocation9], 1
    %s1275 = scalar_lea.sflag [#allocation9], 1
    %1276 = vsyncpa %s1275, 1

</llo_original>
